<compile_context>
chip_gen: v7x
topology: tpu7x:2x2x1
jax: 0.10.0
libtpu: 0.0.40
codegen_flags: <defaults>
</compile_context>

<pallas_src>
import numpy as np
import jax
import jax.numpy as jnp
from jax.experimental import pallas as pl
from jax.experimental.pallas import tpu as pltpu


def _fourier_kernel(coords_ref, b2b_ref, out_ref):
    # coords_ref: (tm, in_dim+1) f32 tile; last column is ones (carries bias).
    # b2b_ref:    (in_dim+1, 2F) f32 resident block; last row = [0..0 | pi/2..pi/2].
    # out_ref:    (tm, 2F) tile.
    phase = jnp.dot(
        coords_ref[...], b2b_ref[...],
        preferred_element_type=jnp.float32,
        precision=jax.lax.Precision.HIGHEST,   # keep K=4 contraction fp32-exact
    )
    # sin(x + pi/2) == cos(x): one transcendental pass produces [sin | cos].
    out_ref[...] = jnp.sin(phase).astype(out_ref.dtype)


def _round_up(x, m):
    return ((x + m - 1) // m) * m


def pos_encoding_fourier(coords, b_gauss_pi, *, tm=4096, out_dtype=None):
    """Fourier positional encoding.

    coords:     (..., in_dim) float
    b_gauss_pi: (in_dim, F) float  (the module's 2*pi*B_gauss buffer)
    returns     (..., 2F) = concat(sin(coords@B), cos(coords@B))

    out_dtype=jnp.bfloat16 can halve HBM write traffic (compute stays f32,
    cast only at the store); tm is kept a multiple of 16 so bf16 tiles cleanly.
    """
    in_dim, F = b_gauss_pi.shape
    two_f = 2 * F
    lead_shape = coords.shape[:-1]
    N = int(np.prod(lead_shape)) if lead_shape else 1
    out_dtype = coords.dtype if out_dtype is None else out_dtype

    coords2d = coords.reshape(N, in_dim).astype(jnp.float32)
    # Ones column: phase bias rides on the matmul; also makes 16-byte input rows.
    coords_aug = jnp.concatenate(
        [coords2d, jnp.ones((N, 1), jnp.float32)], axis=1)          # (N, in_dim+1)

    # Duplicated-B + pi/2 bias row: sin of one (tm, 2F) block gives [sin | cos].
    b2 = jnp.concatenate([b_gauss_pi, b_gauss_pi], axis=1).astype(jnp.float32)
    bias_row = jnp.concatenate(
        [jnp.zeros((1, F), jnp.float32),
         jnp.full((1, F), np.pi / 2.0, jnp.float32)], axis=1)
    b2b = jnp.concatenate([b2, bias_row], axis=0)                    # (in_dim+1, 2F)

    # Row tile: multiple of 16, clamped to the problem, capped so the grid has
    # >= 2 steps (lets "parallel" shard across v7x's two TensorCores).
    tm_eff = min(int(tm), _round_up(N, 16))
    if N > 16:
        tm_eff = min(tm_eff, _round_up((N + 1) // 2, 16))
    tm_eff = max(tm_eff, 16)
    grid = (pl.cdiv(N, tm_eff),)

    cost = pl.CostEstimate(
        flops=2 * N * (in_dim + 1) * two_f,
        transcendentals=N * two_f,
        bytes_accessed=(coords_aug.size + b2b.size) * 4
                       + N * two_f * jnp.dtype(out_dtype).itemsize,
    )

    out2d = pl.pallas_call(
        _fourier_kernel,
        out_shape=jax.ShapeDtypeStruct((N, two_f), out_dtype),
        grid_spec=pltpu.PrefetchScalarGridSpec(
            num_scalar_prefetch=0,
            grid=grid,
            in_specs=[
                pl.BlockSpec((tm_eff, in_dim + 1), lambda i: (i, 0)),
                pl.BlockSpec((in_dim + 1, two_f), lambda i: (0, 0)),  # resident
            ],
            out_specs=pl.BlockSpec((tm_eff, two_f), lambda i: (i, 0)),
        ),
        compiler_params=pltpu.CompilerParams(
            dimension_semantics=("parallel",)),
        cost_estimate=cost,
    )(coords_aug, b2b)

    return out2d.reshape(*lead_shape, two_f)


def make_b_gauss_pi(key, in_dim, num_frequencies, freq_scale):
    """Deterministic stand-in for the module buffer:
    2*pi * (N(0,1) of shape (in_dim, F)) * freq_scale[:, None].
    Matches the PyTorch broadcast: freq_scale is per-coordinate or a length-1 list.
    """
    b = jax.random.normal(key, (in_dim, num_frequencies), dtype=jnp.float32)
    scale = jnp.asarray(freq_scale, dtype=jnp.float32)[:, None]
    return 2.0 * np.pi * b * scale


if __name__ == "__main__":
    key = jax.random.PRNGKey(0)
    k_coords, k_b = jax.random.split(key)

    # Module config: in_dim=3 coords (xyz), 64 Gaussian frequencies, scale [1.0]
    in_dim = 3
    num_frequencies = 64          # -> out_dim = 128
    freq_scale = [1.0]

    B_gauss_pi = make_b_gauss_pi(k_b, in_dim, num_frequencies, freq_scale)

    # Example coords: batch=2, 128 points each, in_dim coordinates.
    coords = jax.random.uniform(k_coords, (2, 128, in_dim), dtype=jnp.float32)

    out = pos_encoding_fourier(coords, B_gauss_pi)
    out = jax.block_until_ready(out)
    assert out.shape == (2, 128, 2 * num_frequencies), out.shape

    # Reference in float64 numpy (original sin/cos-concat formulation), so the
    # check is independent of XLA matmul precision defaults.
    coords_np = np.asarray(coords, dtype=np.float64)
    b_np = np.asarray(B_gauss_pi, dtype=np.float64)
    prod_ref = coords_np @ b_np
    ref = np.concatenate([np.sin(prod_ref), np.cos(prod_ref)], axis=-1)
    np.testing.assert_allclose(np.asarray(out, dtype=np.float64), ref,
                               rtol=1e-5, atol=1e-4)

    print("KERNEL_OK")
</pallas_src>

<mosaic_0001>
module attributes {stable_mosaic.version = 11 : i64} {
  func.func @_fourier_kernel(%arg0: i32, %arg1: memref<128x4xf32, #tpu.memory_space<vmem>>, %arg2: memref<4x128xf32, #tpu.memory_space<vmem>>, %arg3: memref<128x128xf32, #tpu.memory_space<vmem>>) attributes {dimension_semantics = [#tpu.dimension_semantics<parallel>], iteration_bounds = array<i64: 2>, scalar_prefetch = 0 : i64, scratch_operands = 0 : i64, tpu.core_type = #tpu.core_type<tc>, window_params = [{transform_indices = @transform_0, window_bounds = array<i64: 128, 4>}, {pipeline_mode = #tpu.pipeline_mode<synchronous>, transform_indices = @transform_1, window_bounds = array<i64: 4, 128>}, {transform_indices = @transform_2, window_bounds = array<i64: 128, 128>}]} {
    %c0 = arith.constant 0 : index
    %c0_0 = arith.constant 0 : index
    %0 = vector.load %arg1[%c0, %c0_0] : memref<128x4xf32, #tpu.memory_space<vmem>>, vector<128x4xf32>
    %c0_1 = arith.constant 0 : index
    %c0_2 = arith.constant 0 : index
    %1 = vector.load %arg2[%c0_1, %c0_2] : memref<4x128xf32, #tpu.memory_space<vmem>>, vector<4x128xf32>
    %cst = arith.constant dense<0.000000e+00> : vector<128x128xf32>
    %2 = tpu.matmul %0, %1, %cst {dimension_numbers = #tpu.dot_dimension_numbers<[1], [0], [0], [1], [0, 0, 1, 1], [], []>, precision = #tpu.contract_precision<fp32>} : vector<128x4xf32>, vector<4x128xf32>, vector<128x128xf32> -> vector<128x128xf32>
    %3 = math.sin %2 : vector<128x128xf32>
    %c0_3 = arith.constant 0 : index
    %c0_4 = arith.constant 0 : index
    %4 = vector.load %arg3[%c0_3, %c0_4] : memref<128x128xf32, #tpu.memory_space<vmem>>, vector<128x128xf32>
    tpu.vector_store %arg3[%c0_3, %c0_4], %3 {strides = array<i32>} : memref<128x128xf32, #tpu.memory_space<vmem>>, vector<128x128xf32>,
    return
  }
  func.func @transform_0(%arg0: i32) -> (i32, i32) {
    %c0_i32 = arith.constant 0 : i32
    %c0_i32_0 = arith.constant 0 : i32
    return %arg0, %c0_i32 : i32, i32
  }
  func.func @transform_1(%arg0: i32) -> (i32, i32) {
    %c0_i32 = arith.constant 0 : i32
    %c0_i32_0 = arith.constant 0 : i32
    %c0_i32_1 = arith.constant 0 : i32
    return %c0_i32, %c0_i32_0 : i32, i32
  }
  func.func @transform_2(%arg0: i32) -> (i32, i32) {
    %c0_i32 = arith.constant 0 : i32
    %c0_i32_0 = arith.constant 0 : i32
    return %arg0, %c0_i32 : i32, i32
  }
}

</mosaic_0001>

<llo_original>
// kernel: tpu_custom_call.1
$region0: #{tpu_custom_call.1}
  #allocation0 [shape = 'u32[]', space=smem, size = 0x4, offset = 0x4, fixed_abs, tag = 'smem constant byte address 0x4 - core index']
  #allocation1 [shape = 'u32[144,128]{1,0:T(1,128)}', space=vmem, size = 0x12000, scoped, tag = 'internal scratch']
  %s0 = inlined_call_operand.vmem [shape: f32[256,4], index: 0, kind: input, shape index: {}]
  %s1 = inlined_call_operand.vmem [shape: f32[4,128], index: 1, kind: input, shape index: {}]
  %s2 = inlined_call_operand.hbm [shape: f32[256,128], index: 2, kind: output, shape index: {}]
  %s3 = sld [smem:[#allocation0]]
  $region41: #{tpu_custom_call.1} parent=0
    _
  %s5 = ssub.s32 1, %s3
  %s6 = scalar_select 0, %s5, %s3
  $region1: #{tpu_custom_call.1} parent=0
    #allocation2 [shape = 'u8[131072]{0}', space=vmem, size = 0x20000, scoped, tag = 'output window, operand 0']
    #allocation3 [shape = 's32[2]{0}', space=sflag, size = 0x8, scoped, tag = 'scoped memory for tpu_custom_call.1']
    %7 = vsyncpa [#allocation3], 0
    %s8 = scalar_lea.sflag [#allocation3], 1
    %9 = vsyncpa %s8, 0
    loop: start=0, step=1, limit=4
    $region2: #{tpu_custom_call.1} parent=1 // loop_pre_header
      _
    $region3: #{tpu_custom_call.1} parent=1 // loop_header
      %s11 = sphi 0, %s15
      %p12 = scmp.ge.s32.totalorder %s11, 4
      %s21 = sphi 0, %s23
      %s24 = sphi 0, %s21
      %s25 = sphi 0, %s24
      %s41 = sphi 0, %s25
      %s45 = sphi 0, %s45
      %s47 = sphi 0, %s45
      %s48 = sphi 0, %s47
      %s62 = sphi 0, %s48
      %s68 = sphi 0, %s70
      %s71 = sphi 0, %s68
      %s72 = sphi 0, %s71
      %s88 = sphi 0, %s72
    $region4: #{tpu_custom_call.1} parent=1 // loop_header_branch
      %14 = sbr.rel (%p12) target = $region8
    $region5: #{tpu_custom_call.1} parent=1 // loop_body
      %s16 = ssub.s32 %s11, 1
      %s17 = ssub.s32 %s11, 2
      %s18 = sadd.s32 %s11, 1
      %s19 = ssub.s32 %s11, %s18
      %p20 = scmp.eq.s32.totalorder %s19, 0
      %s22 = sadd.s32 %s21, 1
      %s23 = scalar_select %p20, %s21, %s22
      %p26 = pneg %p20
      %p27 = scmp.eq.s32.totalorder %s11, 1
      %p28 = por %p26, %p27
      %p29 = scmp.ne.s32.totalorder %s21, %s24
      %p30 = scmp.eq.s32.totalorder %s11, 0
      %p31 = por %p29, %p30
      %p32 = scmp.ne.s32.totalorder %s21, %s24
      %p33 = scmp.eq.s32.totalorder %s16, 1
      %p34 = por %p32, %p33
      %p35 = scmp.ne.s32.totalorder %s24, %s25
      %p36 = scmp.eq.s32.totalorder %s16, 0
      %p37 = por %p35, %p36
      %p38 = scmp.ne.s32.totalorder %s24, %s25
      %p39 = scmp.eq.s32.totalorder %s17, 1
      %p40 = por %p38, %p39
      %p42 = scmp.ne.s32.totalorder %s25, %s41
      %p43 = scmp.eq.s32.totalorder %s17, 0
      %p44 = por %p42, %p43
      %s46 = sadd.s32 %s45, 1
      %p49 = scmp.eq.s32.totalorder %s11, 1
      %p50 = scmp.ne.s32.totalorder %s45, %s47
      %p51 = scmp.eq.s32.totalorder %s11, 0
      %p52 = por %p50, %p51
      %p53 = scmp.ne.s32.totalorder %s45, %s47
      %p54 = scmp.eq.s32.totalorder %s16, 1
      %p55 = por %p53, %p54
      %p56 = scmp.ne.s32.totalorder %s47, %s48
      %p57 = scmp.eq.s32.totalorder %s16, 0
      %p58 = por %p56, %p57
      %p59 = scmp.ne.s32.totalorder %s47, %s48
      %p60 = scmp.eq.s32.totalorder %s17, 1
      %p61 = por %p59, %p60
      %p63 = scmp.ne.s32.totalorder %s48, %s62
      %p64 = scmp.eq.s32.totalorder %s17, 0
      %p65 = por %p63, %p64
      %s66 = ssub.s32 %s11, %s18
      %p67 = scmp.eq.s32.totalorder %s66, 0
      %s69 = sadd.s32 %s68, 1
      %s70 = scalar_select %p67, %s68, %s69
      %p73 = pneg %p67
      %p74 = scmp.eq.s32.totalorder %s11, 1
      %p75 = por %p73, %p74
      %p76 = scmp.ne.s32.totalorder %s68, %s71
      %p77 = scmp.eq.s32.totalorder %s11, 0
      %p78 = por %p76, %p77
      %p79 = scmp.ne.s32.totalorder %s68, %s71
      %p80 = scmp.eq.s32.totalorder %s16, 1
      %p81 = por %p79, %p80
      %p82 = scmp.ne.s32.totalorder %s71, %s72
      %p83 = scmp.eq.s32.totalorder %s16, 0
      %p84 = por %p82, %p83
      %p85 = scmp.ne.s32.totalorder %s71, %s72
      %p86 = scmp.eq.s32.totalorder %s17, 1
      %p87 = por %p85, %p86
      %p89 = scmp.ne.s32.totalorder %s72, %s88
      %p90 = scmp.eq.s32.totalorder %s17, 0
      %p91 = por %p89, %p90
      %p92 = scmp.le.s32.totalorder 1, %s11
      %p93 = scmp.lt.s32.totalorder %s11, 3
      %p94 = pnand %p92, %p93
      %p95 = pneg %p94
      // Predicated region
      $region9: #{tpu_custom_call.1} parent=5 // pred_check
        _
      $region10: #{tpu_custom_call.1} parent=5 // pred_check_branch
        %97 = sbr.rel (%p94) target = $region12
      $region11: #{tpu_custom_call.1} parent=5 // pred_region
        %s98 = ssub.s32 %s11, 1
        // Predicated region
        $region13: #{tpu_custom_call.1} parent=11 // pred_check
          %p99 = pneg %p58
        $region14: #{tpu_custom_call.1} parent=11 // pred_check_branch
          %101 = sbr.rel (%p99) target = $region16
        $region15: #{tpu_custom_call.1} parent=11 // pred_region
          _
        $region16: #{tpu_custom_call.1} parent=11 // pred_fallthru
          _
      $region12: #{tpu_custom_call.1} parent=5 // pred_fallthru
        _
      %p102 = scmp.lt.s32.totalorder %s11, 2
      // Predicated region
      $region17: #{tpu_custom_call.1} parent=5 // pred_check
        %p103 = pneg %p102
      $region18: #{tpu_custom_call.1} parent=5 // pred_check_branch
        %105 = sbr.rel (%p103) target = $region20
      $region19: #{tpu_custom_call.1} parent=5 // pred_region
        // Predicated region
        $region21: #{tpu_custom_call.1} parent=19 // pred_check
          %p106 = pneg %p31
        $region22: #{tpu_custom_call.1} parent=19 // pred_check_branch
          %108 = sbr.rel (%p106) target = $region24
        $region23: #{tpu_custom_call.1} parent=19 // pred_region
          %s109 = smul.u32 16, %s11
          %p110 = scmp.lt.s32.totalorder %s109, 31
          %s111 = scalar_select %p110, %s109, 31
          %s112 = smul.addr %s111, 8
          %s113 = scalar_lea.vmem %s0, %s112
          %s114 = smul.u32 16, %s11
        $region24: #{tpu_custom_call.1} parent=19 // pred_fallthru
          _
      $region20: #{tpu_custom_call.1} parent=5 // pred_fallthru
        _
      %p115 = scmp.le.s32.totalorder 1, %s11
      %p116 = scmp.lt.s32.totalorder %s11, 3
      %p117 = pnand %p115, %p116
      %p118 = pneg %p117
      // Predicated region
      $region25: #{tpu_custom_call.1} parent=5 // pred_check
        _
      $region26: #{tpu_custom_call.1} parent=5 // pred_check_branch
        %120 = sbr.rel (%p117) target = $region28
      $region27: #{tpu_custom_call.1} parent=5 // pred_region
        %s121 = ssub.s32 %s11, 1
        %s122 = smul.u32 16, %s16
        %p123 = scmp.lt.s32.totalorder %s122, 31
        %s124 = scalar_select %p123, %s122, 31
        %s125 = smul.addr %s124, 8
        %s126 = scalar_lea.vmem %s0, %s125
        %p127 = pneg %p37
        %p128 = pneg %p34
        %p129 = pneg %p58
        %p130 = pneg %p55
        %p131 = pneg %p84
        %p132 = pneg %p81
        %s133 = sand.u32 %s71, 1
        %s134 = scalar_lea.sflag [#allocation3], %s133
        %s135 = sand.u32 %s71, 1
        %s136 = smul.addr %s135, 128
        %s137 = scalar_lea.vmem [#allocation2], %s136
        %s138 = smul.u32 16, %s16
        %p139 = scmp.lt.s32.totalorder %s138, 31
        %s140 = scalar_select %p139, %s138, 31
        %s141 = smul.addr %s140, 8
        %s142 = scalar_lea.vmem %s0, %s141
        %s143 = smul.u32 16, %s16
        %s144 = smul.u32 16, %s16
        %v145 = vld [vmem:[%s142] sm:$0xff]
        %v146 = vld [vmem:[%s142 + $0x8] sm:$0xff]
        %v147 = vld [vmem:[%s142 + $0x10] sm:$0xff]
        %v148 = vld [vmem:[%s142 + $0x18] sm:$0xff]
        %v149 = vld [vmem:[%s142 + $0x20] sm:$0xff]
        %v150 = vld [vmem:[%s142 + $0x28] sm:$0xff]
        %v151 = vld [vmem:[%s142 + $0x30] sm:$0xff]
        %v152 = vld [vmem:[%s142 + $0x38] sm:$0xff]
        %v153 = vld [vmem:[%s142 + $0x40] sm:$0xff]
        %v154 = vld [vmem:[%s142 + $0x48] sm:$0xff]
        %v155 = vld [vmem:[%s142 + $0x50] sm:$0xff]
        %v156 = vld [vmem:[%s142 + $0x58] sm:$0xff]
        %v157 = vld [vmem:[%s142 + $0x60] sm:$0xff]
        %v158 = vld [vmem:[%s142 + $0x68] sm:$0xff]
        %v159 = vld [vmem:[%s142 + $0x70] sm:$0xff]
        %v160 = vld [vmem:[%s142 + $0x78] sm:$0xff]
        %v161 = vld [vmem:[%s1] sm:$0xf]
        %vm162 = vcmask 31744
        %v164 = vsel %vm162, %v145, 0
        %v167 = vsel %vm162, %v146, 0
        %v170 = vsel %vm162, %v147, 0
        %v173 = vsel %vm162, %v148, 0
        %v176 = vsel %vm162, %v149, 0
        %v179 = vsel %vm162, %v150, 0
        %v182 = vsel %vm162, %v151, 0
        %v185 = vsel %vm162, %v152, 0
        %v188 = vsel %vm162, %v153, 0
        %v191 = vsel %vm162, %v154, 0
        %v194 = vsel %vm162, %v155, 0
        %v197 = vsel %vm162, %v156, 0
        %v200 = vsel %vm162, %v157, 0
        %v203 = vsel %vm162, %v158, 0
        %v206 = vsel %vm162, %v159, 0
        %v209 = vsel %vm162, %v160, 0
        %vm211 = vcmask 1043456
        %v213 = vsel %vm211, %v161, 0
        %215 = vmatprep.subr.mxu0 0.0
        %v216 = vand.u32 %v213, 4294901760
        %217 = vmatpush1.msra.mxu0 %v216
        %218 = vmatprep.subr.mxu0 0.0
        %219 = vmatpush1.msra.mxu0 0.0
        %220 = vmatprep.subr.mxu0 0.0
        %221 = vmatpush1.msra.mxu0 0.0
        %222 = vmatprep.subr.mxu0 0.0
        %223 = vmatpush1.msra.mxu0 0.0
        %224 = vmatprep.subr.mxu0 0.0
        %225 = vmatpush1.msra.mxu0 0.0
        %226 = vmatprep.subr.mxu0 0.0
        %227 = vmatpush1.msra.mxu0 0.0
        %228 = vmatprep.subr.mxu0 0.0
        %229 = vmatpush1.msra.mxu0 0.0
        %230 = vmatprep.subr.mxu0 0.0
        %231 = vmatpush1.msra.mxu0 0.0
        %232 = vmatprep.subr.mxu0 0.0
        %233 = vmatpush1.msra.mxu0 0.0
        %234 = vmatprep.subr.mxu0 0.0
        %235 = vmatpush1.msra.mxu0 0.0
        %236 = vmatprep.subr.mxu0 0.0
        %237 = vmatpush1.msra.mxu0 0.0
        %238 = vmatprep.subr.mxu0 0.0
        %239 = vmatpush1.msra.mxu0 0.0
        %240 = vmatprep.subr.mxu0 0.0
        %241 = vmatpush1.msra.mxu0 0.0
        %242 = vmatprep.subr.mxu0 0.0
        %243 = vmatpush1.msra.mxu0 0.0
        %244 = vmatprep.subr.mxu0 0.0
        %245 = vmatpush1.msra.mxu0 0.0
        %246 = vmatprep.subr.mxu0 0.0
        %247 = vmatpush1.msra.mxu0 0.0
        %248 = vmatprep.subr.mxu0 0.0
        %249 = vmatpush1.msra.mxu0 0.0
        %250 = vmatprep.subr.mxu0 0.0
        %251 = vmatpush1.msra.mxu0 0.0
        %252 = vmatprep.subr.mxu0 0.0
        %253 = vmatpush1.msra.mxu0 0.0
        %254 = vmatprep.subr.mxu0 0.0
        %255 = vmatpush1.msra.mxu0 0.0
        %256 = vmatprep.subr.mxu0 0.0
        %257 = vmatpush1.msra.mxu0 0.0
        %258 = vmatprep.subr.mxu0 0.0
        %259 = vmatpush1.msra.mxu0 0.0
        %260 = vmatprep.subr.mxu0 0.0
        %261 = vmatpush1.msra.mxu0 0.0
        %262 = vmatprep.subr.mxu0 0.0
        %263 = vmatpush1.msra.mxu0 0.0
        %264 = vmatprep.subr.mxu0 0.0
        %265 = vmatpush1.msra.mxu0 0.0
        %266 = vmatprep.subr.mxu0 0.0
        %267 = vmatpush1.msra.mxu0 0.0
        %268 = vmatprep.subr.mxu0 0.0
        %269 = vmatpush1.msra.mxu0 0.0
        %270 = vmatprep.subr.mxu0 0.0
        %271 = vmatpush1.msra.mxu0 0.0
        %272 = vmatprep.subr.mxu0 0.0
        %273 = vmatpush1.msra.mxu0 0.0
        %274 = vmatprep.subr.mxu0 0.0
        %275 = vmatpush1.msra.mxu0 0.0
        %276 = vmatprep.subr.mxu0 0.0
        %277 = vmatpush1.msra.mxu0 0.0
        %278 = vmatprep.subr.mxu0 0.0
        %279 = vmatpush1.msra.mxu0 0.0
        %280 = vmatprep.mubr.f32.mxu0 0.0
        %v281 = vand.u32 %v164, 4294901760
        %v282 = vsub.f32 %v164, %v281
        %v283 = vand.u32 %v282, 4294901760
        %v284 = vsub.f32 %v282, %v283
        %v285 = vand.u32 %v284, 4294901760
        %286 = vmatmul.mubr.f32.gmra.mrb[0].mxu0 %v285
        %v287 = vpop.f32.mrb[0].mxu0
        %v288 = vadd.f32 0.0, %v287
        %v289 = vpop.f32.mrb[0].mxu0
        %290 = vmatprep.mubr.f32.mxu0 0.0
        %v291 = vand.u32 %v167, 4294901760
        %v292 = vsub.f32 %v167, %v291
        %v293 = vand.u32 %v292, 4294901760
        %v294 = vsub.f32 %v292, %v293
        %v295 = vand.u32 %v294, 4294901760
        %296 = vmatmul.mubr.f32.gmra.mrb[0].mxu0 %v295
        %v297 = vpop.f32.mrb[0].mxu0
        %v298 = vadd.f32 0.0, %v297
        %v299 = vpop.f32.mrb[0].mxu0
        %300 = vmatprep.mubr.f32.mxu0 0.0
        %v301 = vand.u32 %v170, 4294901760
        %v302 = vsub.f32 %v170, %v301
        %v303 = vand.u32 %v302, 4294901760
        %v304 = vsub.f32 %v302, %v303
        %v305 = vand.u32 %v304, 4294901760
        %306 = vmatmul.mubr.f32.gmra.mrb[0].mxu0 %v305
        %v307 = vpop.f32.mrb[0].mxu0
        %v308 = vadd.f32 0.0, %v307
        %v309 = vpop.f32.mrb[0].mxu0
        %310 = vmatprep.mubr.f32.mxu0 0.0
        %v311 = vand.u32 %v173, 4294901760
        %v312 = vsub.f32 %v173, %v311
        %v313 = vand.u32 %v312, 4294901760
        %v314 = vsub.f32 %v312, %v313
        %v315 = vand.u32 %v314, 4294901760
        %316 = vmatmul.mubr.f32.gmra.mrb[0].mxu0 %v315
        %v317 = vpop.f32.mrb[0].mxu0
        %v318 = vadd.f32 0.0, %v317
        %v319 = vpop.f32.mrb[0].mxu0
        %320 = vmatprep.mubr.f32.mxu0 0.0
        %v321 = vand.u32 %v176, 4294901760
        %v322 = vsub.f32 %v176, %v321
        %v323 = vand.u32 %v322, 4294901760
        %v324 = vsub.f32 %v322, %v323
        %v325 = vand.u32 %v324, 4294901760
        %326 = vmatmul.mubr.f32.gmra.mrb[0].mxu0 %v325
        %v327 = vpop.f32.mrb[0].mxu0
        %v328 = vadd.f32 0.0, %v327
        %v329 = vpop.f32.mrb[0].mxu0
        %330 = vmatprep.mubr.f32.mxu0 0.0
        %v331 = vand.u32 %v179, 4294901760
        %v332 = vsub.f32 %v179, %v331
        %v333 = vand.u32 %v332, 4294901760
        %v334 = vsub.f32 %v332, %v333
        %v335 = vand.u32 %v334, 4294901760
        %336 = vmatmul.mubr.f32.gmra.mrb[0].mxu0 %v335
        %v337 = vpop.f32.mrb[0].mxu0
        %v338 = vadd.f32 0.0, %v337
        %v339 = vpop.f32.mrb[0].mxu0
        %340 = vmatprep.mubr.f32.mxu0 0.0
        %v341 = vand.u32 %v182, 4294901760
        %v342 = vsub.f32 %v182, %v341
        %v343 = vand.u32 %v342, 4294901760
        %v344 = vsub.f32 %v342, %v343
        %v345 = vand.u32 %v344, 4294901760
        %346 = vmatmul.mubr.f32.gmra.mrb[0].mxu0 %v345
        %v347 = vpop.f32.mrb[0].mxu0
        %v348 = vadd.f32 0.0, %v347
        %v349 = vpop.f32.mrb[0].mxu0
        %350 = vmatprep.mubr.f32.mxu0 0.0
        %v351 = vand.u32 %v185, 4294901760
        %v352 = vsub.f32 %v185, %v351
        %v353 = vand.u32 %v352, 4294901760
        %v354 = vsub.f32 %v352, %v353
        %v355 = vand.u32 %v354, 4294901760
        %356 = vmatmul.mubr.f32.gmra.mrb[0].mxu0 %v355
        %v357 = vpop.f32.mrb[0].mxu0
        %v358 = vadd.f32 0.0, %v357
        %v359 = vpop.f32.mrb[0].mxu0
        %360 = vmatprep.mubr.f32.mxu0 0.0
        %v361 = vand.u32 %v188, 4294901760
        %v362 = vsub.f32 %v188, %v361
        %v363 = vand.u32 %v362, 4294901760
        %v364 = vsub.f32 %v362, %v363
        %v365 = vand.u32 %v364, 4294901760
        %366 = vmatmul.mubr.f32.gmra.mrb[0].mxu0 %v365
        %v367 = vpop.f32.mrb[0].mxu0
        %v368 = vadd.f32 0.0, %v367
        %v369 = vpop.f32.mrb[0].mxu0
        %370 = vmatprep.mubr.f32.mxu0 0.0
        %v371 = vand.u32 %v191, 4294901760
        %v372 = vsub.f32 %v191, %v371
        %v373 = vand.u32 %v372, 4294901760
        %v374 = vsub.f32 %v372, %v373
        %v375 = vand.u32 %v374, 4294901760
        %376 = vmatmul.mubr.f32.gmra.mrb[0].mxu0 %v375
        %v377 = vpop.f32.mrb[0].mxu0
        %v378 = vadd.f32 0.0, %v377
        %v379 = vpop.f32.mrb[0].mxu0
        %380 = vmatprep.mubr.f32.mxu0 0.0
        %v381 = vand.u32 %v194, 4294901760
        %v382 = vsub.f32 %v194, %v381
        %v383 = vand.u32 %v382, 4294901760
        %v384 = vsub.f32 %v382, %v383
        %v385 = vand.u32 %v384, 4294901760
        %386 = vmatmul.mubr.f32.gmra.mrb[0].mxu0 %v385
        %v387 = vpop.f32.mrb[0].mxu0
        %v388 = vadd.f32 0.0, %v387
        %v389 = vpop.f32.mrb[0].mxu0
        %390 = vmatprep.mubr.f32.mxu0 0.0
        %v391 = vand.u32 %v197, 4294901760
        %v392 = vsub.f32 %v197, %v391
        %v393 = vand.u32 %v392, 4294901760
        %v394 = vsub.f32 %v392, %v393
        %v395 = vand.u32 %v394, 4294901760
        %396 = vmatmul.mubr.f32.gmra.mrb[0].mxu0 %v395
        %v397 = vpop.f32.mrb[0].mxu0
        %v398 = vadd.f32 0.0, %v397
        %v399 = vpop.f32.mrb[0].mxu0
        %400 = vmatprep.mubr.f32.mxu0 0.0
        %v401 = vand.u32 %v200, 4294901760
        %v402 = vsub.f32 %v200, %v401
        %v403 = vand.u32 %v402, 4294901760
        %v404 = vsub.f32 %v402, %v403
        %v405 = vand.u32 %v404, 4294901760
        %406 = vmatmul.mubr.f32.gmra.mrb[0].mxu0 %v405
        %v407 = vpop.f32.mrb[0].mxu0
        %v408 = vadd.f32 0.0, %v407
        %v409 = vpop.f32.mrb[0].mxu0
        %410 = vmatprep.mubr.f32.mxu0 0.0
        %v411 = vand.u32 %v203, 4294901760
        %v412 = vsub.f32 %v203, %v411
        %v413 = vand.u32 %v412, 4294901760
        %v414 = vsub.f32 %v412, %v413
        %v415 = vand.u32 %v414, 4294901760
        %416 = vmatmul.mubr.f32.gmra.mrb[0].mxu0 %v415
        %v417 = vpop.f32.mrb[0].mxu0
        %v418 = vadd.f32 0.0, %v417
        %v419 = vpop.f32.mrb[0].mxu0
        %420 = vmatprep.mubr.f32.mxu0 0.0
        %v421 = vand.u32 %v206, 4294901760
        %v422 = vsub.f32 %v206, %v421
        %v423 = vand.u32 %v422, 4294901760
        %v424 = vsub.f32 %v422, %v423
        %v425 = vand.u32 %v424, 4294901760
        %426 = vmatmul.mubr.f32.gmra.mrb[0].mxu0 %v425
        %v427 = vpop.f32.mrb[0].mxu0
        %v428 = vadd.f32 0.0, %v427
        %v429 = vpop.f32.mrb[0].mxu0
        %430 = vmatprep.mubr.f32.mxu0 0.0
        %v431 = vand.u32 %v209, 4294901760
        %v432 = vsub.f32 %v209, %v431
        %v433 = vand.u32 %v432, 4294901760
        %v434 = vsub.f32 %v432, %v433
        %v435 = vand.u32 %v434, 4294901760
        %436 = vmatmul.mubr.f32.gmra.mrb[0].mxu0 %v435
        %v437 = vpop.f32.mrb[0].mxu0
        %v438 = vadd.f32 0.0, %v437
        %v439 = vpop.f32.mrb[0].mxu0
        %440 = vdwg.mxu0
        %441 = vmatprep.subr.mxu0 0.0
        %v442 = vand.u32 %v213, 4294901760
        %v443 = vsub.f32 %v213, %v442
        %v444 = vand.u32 %v443, 4294901760
        %v445 = vsub.f32 %v443, %v444
        %v446 = vand.u32 %v445, 4294901760
        %447 = vmatpush1.msra.mxu0 %v446
        %448 = vmatprep.subr.mxu0 0.0
        %449 = vmatpush1.msra.mxu0 0.0
        %450 = vmatprep.subr.mxu0 0.0
        %451 = vmatpush1.msra.mxu0 0.0
        %452 = vmatprep.subr.mxu0 0.0
        %453 = vmatpush1.msra.mxu0 0.0
        %454 = vmatprep.subr.mxu0 0.0
        %455 = vmatpush1.msra.mxu0 0.0
        %456 = vmatprep.subr.mxu0 0.0
        %457 = vmatpush1.msra.mxu0 0.0
        %458 = vmatprep.subr.mxu0 0.0
        %459 = vmatpush1.msra.mxu0 0.0
        %460 = vmatprep.subr.mxu0 0.0
        %461 = vmatpush1.msra.mxu0 0.0
        %462 = vmatprep.subr.mxu0 0.0
        %463 = vmatpush1.msra.mxu0 0.0
        %464 = vmatprep.subr.mxu0 0.0
        %465 = vmatpush1.msra.mxu0 0.0
        %466 = vmatprep.subr.mxu0 0.0
        %467 = vmatpush1.msra.mxu0 0.0
        %468 = vmatprep.subr.mxu0 0.0
        %469 = vmatpush1.msra.mxu0 0.0
        %470 = vmatprep.subr.mxu0 0.0
        %471 = vmatpush1.msra.mxu0 0.0
        %472 = vmatprep.subr.mxu0 0.0
        %473 = vmatpush1.msra.mxu0 0.0
        %474 = vmatprep.subr.mxu0 0.0
        %475 = vmatpush1.msra.mxu0 0.0
        %476 = vmatprep.subr.mxu0 0.0
        %477 = vmatpush1.msra.mxu0 0.0
        %478 = vmatprep.subr.mxu0 0.0
        %479 = vmatpush1.msra.mxu0 0.0
        %480 = vmatprep.subr.mxu0 0.0
        %481 = vmatpush1.msra.mxu0 0.0
        %482 = vmatprep.subr.mxu0 0.0
        %483 = vmatpush1.msra.mxu0 0.0
        %484 = vmatprep.subr.mxu0 0.0
        %485 = vmatpush1.msra.mxu0 0.0
        %486 = vmatprep.subr.mxu0 0.0
        %487 = vmatpush1.msra.mxu0 0.0
        %488 = vmatprep.subr.mxu0 0.0
        %489 = vmatpush1.msra.mxu0 0.0
        %490 = vmatprep.subr.mxu0 0.0
        %491 = vmatpush1.msra.mxu0 0.0
        %492 = vmatprep.subr.mxu0 0.0
        %493 = vmatpush1.msra.mxu0 0.0
        %494 = vmatprep.subr.mxu0 0.0
        %495 = vmatpush1.msra.mxu0 0.0
        %496 = vmatprep.subr.mxu0 0.0
        %497 = vmatpush1.msra.mxu0 0.0
        %498 = vmatprep.subr.mxu0 0.0
        %499 = vmatpush1.msra.mxu0 0.0
        %500 = vmatprep.subr.mxu0 0.0
        %501 = vmatpush1.msra.mxu0 0.0
        %502 = vmatprep.subr.mxu0 0.0
        %503 = vmatpush1.msra.mxu0 0.0
        %504 = vmatprep.subr.mxu0 0.0
        %505 = vmatpush1.msra.mxu0 0.0
        %506 = vmatprep.subr.mxu0 0.0
        %507 = vmatpush1.msra.mxu0 0.0
        %508 = vmatprep.subr.mxu0 0.0
        %509 = vmatpush1.msra.mxu0 0.0
        %510 = vmatprep.mubr.f32.mxu0 0.0
        %v511 = vand.u32 %v164, 4294901760
        %512 = vmatmul.mubr.f32.gmra.mrb[0].mxu0 %v511
        %v513 = vpop.f32.mrb[0].mxu0
        %v514 = vadd.f32 %v288, %v513
        %v515 = vpop.f32.mrb[0].mxu0
        %516 = vmatprep.mubr.f32.mxu0 0.0
        %v517 = vand.u32 %v167, 4294901760
        %518 = vmatmul.mubr.f32.gmra.mrb[0].mxu0 %v517
        %v519 = vpop.f32.mrb[0].mxu0
        %v520 = vadd.f32 %v298, %v519
        %v521 = vpop.f32.mrb[0].mxu0
        %522 = vmatprep.mubr.f32.mxu0 0.0
        %v523 = vand.u32 %v170, 4294901760
        %524 = vmatmul.mubr.f32.gmra.mrb[0].mxu0 %v523
        %v525 = vpop.f32.mrb[0].mxu0
        %v526 = vadd.f32 %v308, %v525
        %v527 = vpop.f32.mrb[0].mxu0
        %528 = vmatprep.mubr.f32.mxu0 0.0
        %v529 = vand.u32 %v173, 4294901760
        %530 = vmatmul.mubr.f32.gmra.mrb[0].mxu0 %v529
        %v531 = vpop.f32.mrb[0].mxu0
        %v532 = vadd.f32 %v318, %v531
        %v533 = vpop.f32.mrb[0].mxu0
        %534 = vmatprep.mubr.f32.mxu0 0.0
        %v535 = vand.u32 %v176, 4294901760
        %536 = vmatmul.mubr.f32.gmra.mrb[0].mxu0 %v535
        %v537 = vpop.f32.mrb[0].mxu0
        %v538 = vadd.f32 %v328, %v537
        %v539 = vpop.f32.mrb[0].mxu0
        %540 = vmatprep.mubr.f32.mxu0 0.0
        %v541 = vand.u32 %v179, 4294901760
        %542 = vmatmul.mubr.f32.gmra.mrb[0].mxu0 %v541
        %v543 = vpop.f32.mrb[0].mxu0
        %v544 = vadd.f32 %v338, %v543
        %v545 = vpop.f32.mrb[0].mxu0
        %546 = vmatprep.mubr.f32.mxu0 0.0
        %v547 = vand.u32 %v182, 4294901760
        %548 = vmatmul.mubr.f32.gmra.mrb[0].mxu0 %v547
        %v549 = vpop.f32.mrb[0].mxu0
        %v550 = vadd.f32 %v348, %v549
        %v551 = vpop.f32.mrb[0].mxu0
        %552 = vmatprep.mubr.f32.mxu0 0.0
        %v553 = vand.u32 %v185, 4294901760
        %554 = vmatmul.mubr.f32.gmra.mrb[0].mxu0 %v553
        %v555 = vpop.f32.mrb[0].mxu0
        %v556 = vadd.f32 %v358, %v555
        %v557 = vpop.f32.mrb[0].mxu0
        %558 = vmatprep.mubr.f32.mxu0 0.0
        %v559 = vand.u32 %v188, 4294901760
        %560 = vmatmul.mubr.f32.gmra.mrb[0].mxu0 %v559
        %v561 = vpop.f32.mrb[0].mxu0
        %v562 = vadd.f32 %v368, %v561
        %v563 = vpop.f32.mrb[0].mxu0
        %564 = vmatprep.mubr.f32.mxu0 0.0
        %v565 = vand.u32 %v191, 4294901760
        %566 = vmatmul.mubr.f32.gmra.mrb[0].mxu0 %v565
        %v567 = vpop.f32.mrb[0].mxu0
        %v568 = vadd.f32 %v378, %v567
        %v569 = vpop.f32.mrb[0].mxu0
        %570 = vmatprep.mubr.f32.mxu0 0.0
        %v571 = vand.u32 %v194, 4294901760
        %572 = vmatmul.mubr.f32.gmra.mrb[0].mxu0 %v571
        %v573 = vpop.f32.mrb[0].mxu0
        %v574 = vadd.f32 %v388, %v573
        %v575 = vpop.f32.mrb[0].mxu0
        %576 = vmatprep.mubr.f32.mxu0 0.0
        %v577 = vand.u32 %v197, 4294901760
        %578 = vmatmul.mubr.f32.gmra.mrb[0].mxu0 %v577
        %v579 = vpop.f32.mrb[0].mxu0
        %v580 = vadd.f32 %v398, %v579
        %v581 = vpop.f32.mrb[0].mxu0
        %582 = vmatprep.mubr.f32.mxu0 0.0
        %v583 = vand.u32 %v200, 4294901760
        %584 = vmatmul.mubr.f32.gmra.mrb[0].mxu0 %v583
        %v585 = vpop.f32.mrb[0].mxu0
        %v586 = vadd.f32 %v408, %v585
        %v587 = vpop.f32.mrb[0].mxu0
        %588 = vmatprep.mubr.f32.mxu0 0.0
        %v589 = vand.u32 %v203, 4294901760
        %590 = vmatmul.mubr.f32.gmra.mrb[0].mxu0 %v589
        %v591 = vpop.f32.mrb[0].mxu0
        %v592 = vadd.f32 %v418, %v591
        %v593 = vpop.f32.mrb[0].mxu0
        %594 = vmatprep.mubr.f32.mxu0 0.0
        %v595 = vand.u32 %v206, 4294901760
        %596 = vmatmul.mubr.f32.gmra.mrb[0].mxu0 %v595
        %v597 = vpop.f32.mrb[0].mxu0
        %v598 = vadd.f32 %v428, %v597
        %v599 = vpop.f32.mrb[0].mxu0
        %600 = vmatprep.mubr.f32.mxu0 0.0
        %v601 = vand.u32 %v209, 4294901760
        %602 = vmatmul.mubr.f32.gmra.mrb[0].mxu0 %v601
        %v603 = vpop.f32.mrb[0].mxu0
        %v604 = vadd.f32 %v438, %v603
        %v605 = vpop.f32.mrb[0].mxu0
        %606 = vdwg.mxu0
        %607 = vmatprep.subr.mxu0 0.0
        %v608 = vand.u32 %v213, 4294901760
        %v609 = vsub.f32 %v213, %v608
        %610 = vmatpush1.msra.mxu0 %v609
        %611 = vmatprep.subr.mxu0 0.0
        %612 = vmatpush1.msra.mxu0 0.0
        %613 = vmatprep.subr.mxu0 0.0
        %614 = vmatpush1.msra.mxu0 0.0
        %615 = vmatprep.subr.mxu0 0.0
        %616 = vmatpush1.msra.mxu0 0.0
        %617 = vmatprep.subr.mxu0 0.0
        %618 = vmatpush1.msra.mxu0 0.0
        %619 = vmatprep.subr.mxu0 0.0
        %620 = vmatpush1.msra.mxu0 0.0
        %621 = vmatprep.subr.mxu0 0.0
        %622 = vmatpush1.msra.mxu0 0.0
        %623 = vmatprep.subr.mxu0 0.0
        %624 = vmatpush1.msra.mxu0 0.0
        %625 = vmatprep.subr.mxu0 0.0
        %626 = vmatpush1.msra.mxu0 0.0
        %627 = vmatprep.subr.mxu0 0.0
        %628 = vmatpush1.msra.mxu0 0.0
        %629 = vmatprep.subr.mxu0 0.0
        %630 = vmatpush1.msra.mxu0 0.0
        %631 = vmatprep.subr.mxu0 0.0
        %632 = vmatpush1.msra.mxu0 0.0
        %633 = vmatprep.subr.mxu0 0.0
        %634 = vmatpush1.msra.mxu0 0.0
        %635 = vmatprep.subr.mxu0 0.0
        %636 = vmatpush1.msra.mxu0 0.0
        %637 = vmatprep.subr.mxu0 0.0
        %638 = vmatpush1.msra.mxu0 0.0
        %639 = vmatprep.subr.mxu0 0.0
        %640 = vmatpush1.msra.mxu0 0.0
        %641 = vmatprep.subr.mxu0 0.0
        %642 = vmatpush1.msra.mxu0 0.0
        %643 = vmatprep.subr.mxu0 0.0
        %644 = vmatpush1.msra.mxu0 0.0
        %645 = vmatprep.subr.mxu0 0.0
        %646 = vmatpush1.msra.mxu0 0.0
        %647 = vmatprep.subr.mxu0 0.0
        %648 = vmatpush1.msra.mxu0 0.0
        %649 = vmatprep.subr.mxu0 0.0
        %650 = vmatpush1.msra.mxu0 0.0
        %651 = vmatprep.subr.mxu0 0.0
        %652 = vmatpush1.msra.mxu0 0.0
        %653 = vmatprep.subr.mxu0 0.0
        %654 = vmatpush1.msra.mxu0 0.0
        %655 = vmatprep.subr.mxu0 0.0
        %656 = vmatpush1.msra.mxu0 0.0
        %657 = vmatprep.subr.mxu0 0.0
        %658 = vmatpush1.msra.mxu0 0.0
        %659 = vmatprep.subr.mxu0 0.0
        %660 = vmatpush1.msra.mxu0 0.0
        %661 = vmatprep.subr.mxu0 0.0
        %662 = vmatpush1.msra.mxu0 0.0
        %663 = vmatprep.subr.mxu0 0.0
        %664 = vmatpush1.msra.mxu0 0.0
        %665 = vmatprep.subr.mxu0 0.0
        %666 = vmatpush1.msra.mxu0 0.0
        %667 = vmatprep.subr.mxu0 0.0
        %668 = vmatpush1.msra.mxu0 0.0
        %669 = vmatprep.subr.mxu0 0.0
        %670 = vmatpush1.msra.mxu0 0.0
        %671 = vmatprep.subr.mxu0 0.0
        %672 = vmatpush1.msra.mxu0 0.0
        %673 = vmatprep.mubr.f32.mxu0 0.0
        %v674 = vand.u32 %v164, 4294901760
        %v675 = vsub.f32 %v164, %v674
        %676 = vmatmul.mubr.f32.gmra.mrb[0].mxu0 %v675
        %v677 = vpop.f32.mrb[0].mxu0
        %v678 = vadd.f32 %v514, %v677
        %v679 = vpop.f32.mrb[0].mxu0
        %680 = vmatprep.mubr.f32.mxu0 0.0
        %v681 = vand.u32 %v167, 4294901760
        %v682 = vsub.f32 %v167, %v681
        %683 = vmatmul.mubr.f32.gmra.mrb[0].mxu0 %v682
        %v684 = vpop.f32.mrb[0].mxu0
        %v685 = vadd.f32 %v520, %v684
        %v686 = vpop.f32.mrb[0].mxu0
        %687 = vmatprep.mubr.f32.mxu0 0.0
        %v688 = vand.u32 %v170, 4294901760
        %v689 = vsub.f32 %v170, %v688
        %690 = vmatmul.mubr.f32.gmra.mrb[0].mxu0 %v689
        %v691 = vpop.f32.mrb[0].mxu0
        %v692 = vadd.f32 %v526, %v691
        %v693 = vpop.f32.mrb[0].mxu0
        %694 = vmatprep.mubr.f32.mxu0 0.0
        %v695 = vand.u32 %v173, 4294901760
        %v696 = vsub.f32 %v173, %v695
        %697 = vmatmul.mubr.f32.gmra.mrb[0].mxu0 %v696
        %v698 = vpop.f32.mrb[0].mxu0
        %v699 = vadd.f32 %v532, %v698
        %v700 = vpop.f32.mrb[0].mxu0
        %701 = vmatprep.mubr.f32.mxu0 0.0
        %v702 = vand.u32 %v176, 4294901760
        %v703 = vsub.f32 %v176, %v702
        %704 = vmatmul.mubr.f32.gmra.mrb[0].mxu0 %v703
        %v705 = vpop.f32.mrb[0].mxu0
        %v706 = vadd.f32 %v538, %v705
        %v707 = vpop.f32.mrb[0].mxu0
        %708 = vmatprep.mubr.f32.mxu0 0.0
        %v709 = vand.u32 %v179, 4294901760
        %v710 = vsub.f32 %v179, %v709
        %711 = vmatmul.mubr.f32.gmra.mrb[0].mxu0 %v710
        %v712 = vpop.f32.mrb[0].mxu0
        %v713 = vadd.f32 %v544, %v712
        %v714 = vpop.f32.mrb[0].mxu0
        %715 = vmatprep.mubr.f32.mxu0 0.0
        %v716 = vand.u32 %v182, 4294901760
        %v717 = vsub.f32 %v182, %v716
        %718 = vmatmul.mubr.f32.gmra.mrb[0].mxu0 %v717
        %v719 = vpop.f32.mrb[0].mxu0
        %v720 = vadd.f32 %v550, %v719
        %v721 = vpop.f32.mrb[0].mxu0
        %722 = vmatprep.mubr.f32.mxu0 0.0
        %v723 = vand.u32 %v185, 4294901760
        %v724 = vsub.f32 %v185, %v723
        %725 = vmatmul.mubr.f32.gmra.mrb[0].mxu0 %v724
        %v726 = vpop.f32.mrb[0].mxu0
        %v727 = vadd.f32 %v556, %v726
        %v728 = vpop.f32.mrb[0].mxu0
        %729 = vmatprep.mubr.f32.mxu0 0.0
        %v730 = vand.u32 %v188, 4294901760
        %v731 = vsub.f32 %v188, %v730
        %732 = vmatmul.mubr.f32.gmra.mrb[0].mxu0 %v731
        %v733 = vpop.f32.mrb[0].mxu0
        %v734 = vadd.f32 %v562, %v733
        %v735 = vpop.f32.mrb[0].mxu0
        %736 = vmatprep.mubr.f32.mxu0 0.0
        %v737 = vand.u32 %v191, 4294901760
        %v738 = vsub.f32 %v191, %v737
        %739 = vmatmul.mubr.f32.gmra.mrb[0].mxu0 %v738
        %v740 = vpop.f32.mrb[0].mxu0
        %v741 = vadd.f32 %v568, %v740
        %v742 = vpop.f32.mrb[0].mxu0
        %743 = vmatprep.mubr.f32.mxu0 0.0
        %v744 = vand.u32 %v194, 4294901760
        %v745 = vsub.f32 %v194, %v744
        %746 = vmatmul.mubr.f32.gmra.mrb[0].mxu0 %v745
        %v747 = vpop.f32.mrb[0].mxu0
        %v748 = vadd.f32 %v574, %v747
        %v749 = vpop.f32.mrb[0].mxu0
        %750 = vmatprep.mubr.f32.mxu0 0.0
        %v751 = vand.u32 %v197, 4294901760
        %v752 = vsub.f32 %v197, %v751
        %753 = vmatmul.mubr.f32.gmra.mrb[0].mxu0 %v752
        %v754 = vpop.f32.mrb[0].mxu0
        %v755 = vadd.f32 %v580, %v754
        %v756 = vpop.f32.mrb[0].mxu0
        %757 = vmatprep.mubr.f32.mxu0 0.0
        %v758 = vand.u32 %v200, 4294901760
        %v759 = vsub.f32 %v200, %v758
        %760 = vmatmul.mubr.f32.gmra.mrb[0].mxu0 %v759
        %v761 = vpop.f32.mrb[0].mxu0
        %v762 = vadd.f32 %v586, %v761
        %v763 = vpop.f32.mrb[0].mxu0
        %764 = vmatprep.mubr.f32.mxu0 0.0
        %v765 = vand.u32 %v203, 4294901760
        %v766 = vsub.f32 %v203, %v765
        %767 = vmatmul.mubr.f32.gmra.mrb[0].mxu0 %v766
        %v768 = vpop.f32.mrb[0].mxu0
        %v769 = vadd.f32 %v592, %v768
        %v770 = vpop.f32.mrb[0].mxu0
        %771 = vmatprep.mubr.f32.mxu0 0.0
        %v772 = vand.u32 %v206, 4294901760
        %v773 = vsub.f32 %v206, %v772
        %774 = vmatmul.mubr.f32.gmra.mrb[0].mxu0 %v773
        %v775 = vpop.f32.mrb[0].mxu0
        %v776 = vadd.f32 %v598, %v775
        %v777 = vpop.f32.mrb[0].mxu0
        %778 = vmatprep.mubr.f32.mxu0 0.0
        %v779 = vand.u32 %v209, 4294901760
        %v780 = vsub.f32 %v209, %v779
        %781 = vmatmul.mubr.f32.gmra.mrb[0].mxu0 %v780
        %v782 = vpop.f32.mrb[0].mxu0
        %v783 = vadd.f32 %v604, %v782
        %v784 = vpop.f32.mrb[0].mxu0
        %785 = vdwg.mxu0
        %786 = vmatprep.subr.mxu0 0.0
        %v787 = vand.u32 %v213, 4294901760
        %788 = vmatpush1.msra.mxu0 %v787
        %789 = vmatprep.subr.mxu0 0.0
        %790 = vmatpush1.msra.mxu0 0.0
        %791 = vmatprep.subr.mxu0 0.0
        %792 = vmatpush1.msra.mxu0 0.0
        %793 = vmatprep.subr.mxu0 0.0
        %794 = vmatpush1.msra.mxu0 0.0
        %795 = vmatprep.subr.mxu0 0.0
        %796 = vmatpush1.msra.mxu0 0.0
        %797 = vmatprep.subr.mxu0 0.0
        %798 = vmatpush1.msra.mxu0 0.0
        %799 = vmatprep.subr.mxu0 0.0
        %800 = vmatpush1.msra.mxu0 0.0
        %801 = vmatprep.subr.mxu0 0.0
        %802 = vmatpush1.msra.mxu0 0.0
        %803 = vmatprep.subr.mxu0 0.0
        %804 = vmatpush1.msra.mxu0 0.0
        %805 = vmatprep.subr.mxu0 0.0
        %806 = vmatpush1.msra.mxu0 0.0
        %807 = vmatprep.subr.mxu0 0.0
        %808 = vmatpush1.msra.mxu0 0.0
        %809 = vmatprep.subr.mxu0 0.0
        %810 = vmatpush1.msra.mxu0 0.0
        %811 = vmatprep.subr.mxu0 0.0
        %812 = vmatpush1.msra.mxu0 0.0
        %813 = vmatprep.subr.mxu0 0.0
        %814 = vmatpush1.msra.mxu0 0.0
        %815 = vmatprep.subr.mxu0 0.0
        %816 = vmatpush1.msra.mxu0 0.0
        %817 = vmatprep.subr.mxu0 0.0
        %818 = vmatpush1.msra.mxu0 0.0
        %819 = vmatprep.subr.mxu0 0.0
        %820 = vmatpush1.msra.mxu0 0.0
        %821 = vmatprep.subr.mxu0 0.0
        %822 = vmatpush1.msra.mxu0 0.0
        %823 = vmatprep.subr.mxu0 0.0
        %824 = vmatpush1.msra.mxu0 0.0
        %825 = vmatprep.subr.mxu0 0.0
        %826 = vmatpush1.msra.mxu0 0.0
        %827 = vmatprep.subr.mxu0 0.0
        %828 = vmatpush1.msra.mxu0 0.0
        %829 = vmatprep.subr.mxu0 0.0
        %830 = vmatpush1.msra.mxu0 0.0
        %831 = vmatprep.subr.mxu0 0.0
        %832 = vmatpush1.msra.mxu0 0.0
        %833 = vmatprep.subr.mxu0 0.0
        %834 = vmatpush1.msra.mxu0 0.0
        %835 = vmatprep.subr.mxu0 0.0
        %836 = vmatpush1.msra.mxu0 0.0
        %837 = vmatprep.subr.mxu0 0.0
        %838 = vmatpush1.msra.mxu0 0.0
        %839 = vmatprep.subr.mxu0 0.0
        %840 = vmatpush1.msra.mxu0 0.0
        %841 = vmatprep.subr.mxu0 0.0
        %842 = vmatpush1.msra.mxu0 0.0
        %843 = vmatprep.subr.mxu0 0.0
        %844 = vmatpush1.msra.mxu0 0.0
        %845 = vmatprep.subr.mxu0 0.0
        %846 = vmatpush1.msra.mxu0 0.0
        %847 = vmatprep.subr.mxu0 0.0
        %848 = vmatpush1.msra.mxu0 0.0
        %849 = vmatprep.subr.mxu0 0.0
        %850 = vmatpush1.msra.mxu0 0.0
        %851 = vmatprep.mubr.f32.mxu0 0.0
        %v852 = vand.u32 %v164, 4294901760
        %v853 = vsub.f32 %v164, %v852
        %v854 = vand.u32 %v853, 4294901760
        %855 = vmatmul.mubr.f32.gmra.mrb[0].mxu0 %v854
        %v856 = vpop.f32.mrb[0].mxu0
        %v857 = vadd.f32 %v678, %v856
        %v858 = vpop.f32.mrb[0].mxu0
        %859 = vmatprep.mubr.f32.mxu0 0.0
        %v860 = vand.u32 %v167, 4294901760
        %v861 = vsub.f32 %v167, %v860
        %v862 = vand.u32 %v861, 4294901760
        %863 = vmatmul.mubr.f32.gmra.mrb[0].mxu0 %v862
        %v864 = vpop.f32.mrb[0].mxu0
        %v865 = vadd.f32 %v685, %v864
        %v866 = vpop.f32.mrb[0].mxu0
        %867 = vmatprep.mubr.f32.mxu0 0.0
        %v868 = vand.u32 %v170, 4294901760
        %v869 = vsub.f32 %v170, %v868
        %v870 = vand.u32 %v869, 4294901760
        %871 = vmatmul.mubr.f32.gmra.mrb[0].mxu0 %v870
        %v872 = vpop.f32.mrb[0].mxu0
        %v873 = vadd.f32 %v692, %v872
        %v874 = vpop.f32.mrb[0].mxu0
        %875 = vmatprep.mubr.f32.mxu0 0.0
        %v876 = vand.u32 %v173, 4294901760
        %v877 = vsub.f32 %v173, %v876
        %v878 = vand.u32 %v877, 4294901760
        %879 = vmatmul.mubr.f32.gmra.mrb[0].mxu0 %v878
        %v880 = vpop.f32.mrb[0].mxu0
        %v881 = vadd.f32 %v699, %v880
        %v882 = vpop.f32.mrb[0].mxu0
        %883 = vmatprep.mubr.f32.mxu0 0.0
        %v884 = vand.u32 %v176, 4294901760
        %v885 = vsub.f32 %v176, %v884
        %v886 = vand.u32 %v885, 4294901760
        %887 = vmatmul.mubr.f32.gmra.mrb[0].mxu0 %v886
        %v888 = vpop.f32.mrb[0].mxu0
        %v889 = vadd.f32 %v706, %v888
        %v890 = vpop.f32.mrb[0].mxu0
        %891 = vmatprep.mubr.f32.mxu0 0.0
        %v892 = vand.u32 %v179, 4294901760
        %v893 = vsub.f32 %v179, %v892
        %v894 = vand.u32 %v893, 4294901760
        %895 = vmatmul.mubr.f32.gmra.mrb[0].mxu0 %v894
        %v896 = vpop.f32.mrb[0].mxu0
        %v897 = vadd.f32 %v713, %v896
        %v898 = vpop.f32.mrb[0].mxu0
        %899 = vmatprep.mubr.f32.mxu0 0.0
        %v900 = vand.u32 %v182, 4294901760
        %v901 = vsub.f32 %v182, %v900
        %v902 = vand.u32 %v901, 4294901760
        %903 = vmatmul.mubr.f32.gmra.mrb[0].mxu0 %v902
        %v904 = vpop.f32.mrb[0].mxu0
        %v905 = vadd.f32 %v720, %v904
        %v906 = vpop.f32.mrb[0].mxu0
        %907 = vmatprep.mubr.f32.mxu0 0.0
        %v908 = vand.u32 %v185, 4294901760
        %v909 = vsub.f32 %v185, %v908
        %v910 = vand.u32 %v909, 4294901760
        %911 = vmatmul.mubr.f32.gmra.mrb[0].mxu0 %v910
        %v912 = vpop.f32.mrb[0].mxu0
        %v913 = vadd.f32 %v727, %v912
        %v914 = vpop.f32.mrb[0].mxu0
        %915 = vmatprep.mubr.f32.mxu0 0.0
        %v916 = vand.u32 %v188, 4294901760
        %v917 = vsub.f32 %v188, %v916
        %v918 = vand.u32 %v917, 4294901760
        %919 = vmatmul.mubr.f32.gmra.mrb[0].mxu0 %v918
        %v920 = vpop.f32.mrb[0].mxu0
        %v921 = vadd.f32 %v734, %v920
        %v922 = vpop.f32.mrb[0].mxu0
        %923 = vmatprep.mubr.f32.mxu0 0.0
        %v924 = vand.u32 %v191, 4294901760
        %v925 = vsub.f32 %v191, %v924
        %v926 = vand.u32 %v925, 4294901760
        %927 = vmatmul.mubr.f32.gmra.mrb[0].mxu0 %v926
        %v928 = vpop.f32.mrb[0].mxu0
        %v929 = vadd.f32 %v741, %v928
        %v930 = vpop.f32.mrb[0].mxu0
        %931 = vmatprep.mubr.f32.mxu0 0.0
        %v932 = vand.u32 %v194, 4294901760
        %v933 = vsub.f32 %v194, %v932
        %v934 = vand.u32 %v933, 4294901760
        %935 = vmatmul.mubr.f32.gmra.mrb[0].mxu0 %v934
        %v936 = vpop.f32.mrb[0].mxu0
        %v937 = vadd.f32 %v748, %v936
        %v938 = vpop.f32.mrb[0].mxu0
        %939 = vmatprep.mubr.f32.mxu0 0.0
        %v940 = vand.u32 %v197, 4294901760
        %v941 = vsub.f32 %v197, %v940
        %v942 = vand.u32 %v941, 4294901760
        %943 = vmatmul.mubr.f32.gmra.mrb[0].mxu0 %v942
        %v944 = vpop.f32.mrb[0].mxu0
        %v945 = vadd.f32 %v755, %v944
        %v946 = vpop.f32.mrb[0].mxu0
        %947 = vmatprep.mubr.f32.mxu0 0.0
        %v948 = vand.u32 %v200, 4294901760
        %v949 = vsub.f32 %v200, %v948
        %v950 = vand.u32 %v949, 4294901760
        %951 = vmatmul.mubr.f32.gmra.mrb[0].mxu0 %v950
        %v952 = vpop.f32.mrb[0].mxu0
        %v953 = vadd.f32 %v762, %v952
        %v954 = vpop.f32.mrb[0].mxu0
        %955 = vmatprep.mubr.f32.mxu0 0.0
        %v956 = vand.u32 %v203, 4294901760
        %v957 = vsub.f32 %v203, %v956
        %v958 = vand.u32 %v957, 4294901760
        %959 = vmatmul.mubr.f32.gmra.mrb[0].mxu0 %v958
        %v960 = vpop.f32.mrb[0].mxu0
        %v961 = vadd.f32 %v769, %v960
        %v962 = vpop.f32.mrb[0].mxu0
        %963 = vmatprep.mubr.f32.mxu0 0.0
        %v964 = vand.u32 %v206, 4294901760
        %v965 = vsub.f32 %v206, %v964
        %v966 = vand.u32 %v965, 4294901760
        %967 = vmatmul.mubr.f32.gmra.mrb[0].mxu0 %v966
        %v968 = vpop.f32.mrb[0].mxu0
        %v969 = vadd.f32 %v776, %v968
        %v970 = vpop.f32.mrb[0].mxu0
        %971 = vmatprep.mubr.f32.mxu0 0.0
        %v972 = vand.u32 %v209, 4294901760
        %v973 = vsub.f32 %v209, %v972
        %v974 = vand.u32 %v973, 4294901760
        %975 = vmatmul.mubr.f32.gmra.mrb[0].mxu0 %v974
        %v976 = vpop.f32.mrb[0].mxu0
        %v977 = vadd.f32 %v783, %v976
        %v978 = vpop.f32.mrb[0].mxu0
        %979 = vdwg.mxu0
        %980 = vmatprep.subr.mxu0 0.0
        %v981 = vand.u32 %v213, 4294901760
        %v982 = vsub.f32 %v213, %v981
        %v983 = vand.u32 %v982, 4294901760
        %984 = vmatpush1.msra.mxu0 %v983
        %985 = vmatprep.subr.mxu0 0.0
        %986 = vmatpush1.msra.mxu0 0.0
        %987 = vmatprep.subr.mxu0 0.0
        %988 = vmatpush1.msra.mxu0 0.0
        %989 = vmatprep.subr.mxu0 0.0
        %990 = vmatpush1.msra.mxu0 0.0
        %991 = vmatprep.subr.mxu0 0.0
        %992 = vmatpush1.msra.mxu0 0.0
        %993 = vmatprep.subr.mxu0 0.0
        %994 = vmatpush1.msra.mxu0 0.0
        %995 = vmatprep.subr.mxu0 0.0
        %996 = vmatpush1.msra.mxu0 0.0
        %997 = vmatprep.subr.mxu0 0.0
        %998 = vmatpush1.msra.mxu0 0.0
        %999 = vmatprep.subr.mxu0 0.0
        %1000 = vmatpush1.msra.mxu0 0.0
        %1001 = vmatprep.subr.mxu0 0.0
        %1002 = vmatpush1.msra.mxu0 0.0
        %1003 = vmatprep.subr.mxu0 0.0
        %1004 = vmatpush1.msra.mxu0 0.0
        %1005 = vmatprep.subr.mxu0 0.0
        %1006 = vmatpush1.msra.mxu0 0.0
        %1007 = vmatprep.subr.mxu0 0.0
        %1008 = vmatpush1.msra.mxu0 0.0
        %1009 = vmatprep.subr.mxu0 0.0
        %1010 = vmatpush1.msra.mxu0 0.0
        %1011 = vmatprep.subr.mxu0 0.0
        %1012 = vmatpush1.msra.mxu0 0.0
        %1013 = vmatprep.subr.mxu0 0.0
        %1014 = vmatpush1.msra.mxu0 0.0
        %1015 = vmatprep.subr.mxu0 0.0
        %1016 = vmatpush1.msra.mxu0 0.0
        %1017 = vmatprep.subr.mxu0 0.0
        %1018 = vmatpush1.msra.mxu0 0.0
        %1019 = vmatprep.subr.mxu0 0.0
        %1020 = vmatpush1.msra.mxu0 0.0
        %1021 = vmatprep.subr.mxu0 0.0
        %1022 = vmatpush1.msra.mxu0 0.0
        %1023 = vmatprep.subr.mxu0 0.0
        %1024 = vmatpush1.msra.mxu0 0.0
        %1025 = vmatprep.subr.mxu0 0.0
        %1026 = vmatpush1.msra.mxu0 0.0
        %1027 = vmatprep.subr.mxu0 0.0
        %1028 = vmatpush1.msra.mxu0 0.0
        %1029 = vmatprep.subr.mxu0 0.0
        %1030 = vmatpush1.msra.mxu0 0.0
        %1031 = vmatprep.subr.mxu0 0.0
        %1032 = vmatpush1.msra.mxu0 0.0
        %1033 = vmatprep.subr.mxu0 0.0
        %1034 = vmatpush1.msra.mxu0 0.0
        %1035 = vmatprep.subr.mxu0 0.0
        %1036 = vmatpush1.msra.mxu0 0.0
        %1037 = vmatprep.subr.mxu0 0.0
        %1038 = vmatpush1.msra.mxu0 0.0
        %1039 = vmatprep.subr.mxu0 0.0
        %1040 = vmatpush1.msra.mxu0 0.0
        %1041 = vmatprep.subr.mxu0 0.0
        %1042 = vmatpush1.msra.mxu0 0.0
        %1043 = vmatprep.subr.mxu0 0.0
        %1044 = vmatpush1.msra.mxu0 0.0
        %1045 = vmatprep.subr.mxu0 0.0
        %1046 = vmatpush1.msra.mxu0 0.0
        %1047 = vmatprep.mubr.f32.mxu0 0.0
        %v1048 = vand.u32 %v164, 4294901760
        %1049 = vmatmul.mubr.f32.gmra.mrb[0].mxu0 %v1048
        %v1050 = vpop.f32.mrb[0].mxu0
        %v1051 = vadd.f32 %v857, %v1050
        %v1052 = vpop.f32.mrb[0].mxu0
        %1053 = vmatprep.mubr.f32.mxu0 0.0
        %v1054 = vand.u32 %v167, 4294901760
        %1055 = vmatmul.mubr.f32.gmra.mrb[0].mxu0 %v1054
        %v1056 = vpop.f32.mrb[0].mxu0
        %v1057 = vadd.f32 %v865, %v1056
        %v1058 = vpop.f32.mrb[0].mxu0
        %1059 = vmatprep.mubr.f32.mxu0 0.0
        %v1060 = vand.u32 %v170, 4294901760
        %1061 = vmatmul.mubr.f32.gmra.mrb[0].mxu0 %v1060
        %v1062 = vpop.f32.mrb[0].mxu0
        %v1063 = vadd.f32 %v873, %v1062
        %v1064 = vpop.f32.mrb[0].mxu0
        %1065 = vmatprep.mubr.f32.mxu0 0.0
        %v1066 = vand.u32 %v173, 4294901760
        %1067 = vmatmul.mubr.f32.gmra.mrb[0].mxu0 %v1066
        %v1068 = vpop.f32.mrb[0].mxu0
        %v1069 = vadd.f32 %v881, %v1068
        %v1070 = vpop.f32.mrb[0].mxu0
        %1071 = vmatprep.mubr.f32.mxu0 0.0
        %v1072 = vand.u32 %v176, 4294901760
        %1073 = vmatmul.mubr.f32.gmra.mrb[0].mxu0 %v1072
        %v1074 = vpop.f32.mrb[0].mxu0
        %v1075 = vadd.f32 %v889, %v1074
        %v1076 = vpop.f32.mrb[0].mxu0
        %1077 = vmatprep.mubr.f32.mxu0 0.0
        %v1078 = vand.u32 %v179, 4294901760
        %1079 = vmatmul.mubr.f32.gmra.mrb[0].mxu0 %v1078
        %v1080 = vpop.f32.mrb[0].mxu0
        %v1081 = vadd.f32 %v897, %v1080
        %v1082 = vpop.f32.mrb[0].mxu0
        %1083 = vmatprep.mubr.f32.mxu0 0.0
        %v1084 = vand.u32 %v182, 4294901760
        %1085 = vmatmul.mubr.f32.gmra.mrb[0].mxu0 %v1084
        %v1086 = vpop.f32.mrb[0].mxu0
        %v1087 = vadd.f32 %v905, %v1086
        %v1088 = vpop.f32.mrb[0].mxu0
        %1089 = vmatprep.mubr.f32.mxu0 0.0
        %v1090 = vand.u32 %v185, 4294901760
        %1091 = vmatmul.mubr.f32.gmra.mrb[0].mxu0 %v1090
        %v1092 = vpop.f32.mrb[0].mxu0
        %v1093 = vadd.f32 %v913, %v1092
        %v1094 = vpop.f32.mrb[0].mxu0
        %1095 = vmatprep.mubr.f32.mxu0 0.0
        %v1096 = vand.u32 %v188, 4294901760
        %1097 = vmatmul.mubr.f32.gmra.mrb[0].mxu0 %v1096
        %v1098 = vpop.f32.mrb[0].mxu0
        %v1099 = vadd.f32 %v921, %v1098
        %v1100 = vpop.f32.mrb[0].mxu0
        %1101 = vmatprep.mubr.f32.mxu0 0.0
        %v1102 = vand.u32 %v191, 4294901760
        %1103 = vmatmul.mubr.f32.gmra.mrb[0].mxu0 %v1102
        %v1104 = vpop.f32.mrb[0].mxu0
        %v1105 = vadd.f32 %v929, %v1104
        %v1106 = vpop.f32.mrb[0].mxu0
        %1107 = vmatprep.mubr.f32.mxu0 0.0
        %v1108 = vand.u32 %v194, 4294901760
        %1109 = vmatmul.mubr.f32.gmra.mrb[0].mxu0 %v1108
        %v1110 = vpop.f32.mrb[0].mxu0
        %v1111 = vadd.f32 %v937, %v1110
        %v1112 = vpop.f32.mrb[0].mxu0
        %1113 = vmatprep.mubr.f32.mxu0 0.0
        %v1114 = vand.u32 %v197, 4294901760
        %1115 = vmatmul.mubr.f32.gmra.mrb[0].mxu0 %v1114
        %v1116 = vpop.f32.mrb[0].mxu0
        %v1117 = vadd.f32 %v945, %v1116
        %v1118 = vpop.f32.mrb[0].mxu0
        %1119 = vmatprep.mubr.f32.mxu0 0.0
        %v1120 = vand.u32 %v200, 4294901760
        %1121 = vmatmul.mubr.f32.gmra.mrb[0].mxu0 %v1120
        %v1122 = vpop.f32.mrb[0].mxu0
        %v1123 = vadd.f32 %v953, %v1122
        %v1124 = vpop.f32.mrb[0].mxu0
        %1125 = vmatprep.mubr.f32.mxu0 0.0
        %v1126 = vand.u32 %v203, 4294901760
        %1127 = vmatmul.mubr.f32.gmra.mrb[0].mxu0 %v1126
        %v1128 = vpop.f32.mrb[0].mxu0
        %v1129 = vadd.f32 %v961, %v1128
        %v1130 = vpop.f32.mrb[0].mxu0
        %1131 = vmatprep.mubr.f32.mxu0 0.0
        %v1132 = vand.u32 %v206, 4294901760
        %1133 = vmatmul.mubr.f32.gmra.mrb[0].mxu0 %v1132
        %v1134 = vpop.f32.mrb[0].mxu0
        %v1135 = vadd.f32 %v969, %v1134
        %v1136 = vpop.f32.mrb[0].mxu0
        %1137 = vmatprep.mubr.f32.mxu0 0.0
        %v1138 = vand.u32 %v209, 4294901760
        %1139 = vmatmul.mubr.f32.gmra.mrb[0].mxu0 %v1138
        %v1140 = vpop.f32.mrb[0].mxu0
        %v1141 = vadd.f32 %v977, %v1140
        %v1142 = vpop.f32.mrb[0].mxu0
        %1143 = vdwg.mxu0
        %1144 = vmatprep.subr.mxu0 0.0
        %v1145 = vand.u32 %v213, 4294901760
        %1146 = vmatpush1.msra.mxu0 %v1145
        %1147 = vmatprep.subr.mxu0 0.0
        %1148 = vmatpush1.msra.mxu0 0.0
        %1149 = vmatprep.subr.mxu0 0.0
        %1150 = vmatpush1.msra.mxu0 0.0
        %1151 = vmatprep.subr.mxu0 0.0
        %1152 = vmatpush1.msra.mxu0 0.0
        %1153 = vmatprep.subr.mxu0 0.0
        %1154 = vmatpush1.msra.mxu0 0.0
        %1155 = vmatprep.subr.mxu0 0.0
        %1156 = vmatpush1.msra.mxu0 0.0
        %1157 = vmatprep.subr.mxu0 0.0
        %1158 = vmatpush1.msra.mxu0 0.0
        %1159 = vmatprep.subr.mxu0 0.0
        %1160 = vmatpush1.msra.mxu0 0.0
        %1161 = vmatprep.subr.mxu0 0.0
        %1162 = vmatpush1.msra.mxu0 0.0
        %1163 = vmatprep.subr.mxu0 0.0
        %1164 = vmatpush1.msra.mxu0 0.0
        %1165 = vmatprep.subr.mxu0 0.0
        %1166 = vmatpush1.msra.mxu0 0.0
        %1167 = vmatprep.subr.mxu0 0.0
        %1168 = vmatpush1.msra.mxu0 0.0
        %1169 = vmatprep.subr.mxu0 0.0
        %1170 = vmatpush1.msra.mxu0 0.0
        %1171 = vmatprep.subr.mxu0 0.0
        %1172 = vmatpush1.msra.mxu0 0.0
        %1173 = vmatprep.subr.mxu0 0.0
        %1174 = vmatpush1.msra.mxu0 0.0
        %1175 = vmatprep.subr.mxu0 0.0
        %1176 = vmatpush1.msra.mxu0 0.0
        %1177 = vmatprep.subr.mxu0 0.0
        %1178 = vmatpush1.msra.mxu0 0.0
        %1179 = vmatprep.subr.mxu0 0.0
        %1180 = vmatpush1.msra.mxu0 0.0
        %1181 = vmatprep.subr.mxu0 0.0
        %1182 = vmatpush1.msra.mxu0 0.0
        %1183 = vmatprep.subr.mxu0 0.0
        %1184 = vmatpush1.msra.mxu0 0.0
        %1185 = vmatprep.subr.mxu0 0.0
        %1186 = vmatpush1.msra.mxu0 0.0
        %1187 = vmatprep.subr.mxu0 0.0
        %1188 = vmatpush1.msra.mxu0 0.0
        %1189 = vmatprep.subr.mxu0 0.0
        %1190 = vmatpush1.msra.mxu0 0.0
        %1191 = vmatprep.subr.mxu0 0.0
        %1192 = vmatpush1.msra.mxu0 0.0
        %1193 = vmatprep.subr.mxu0 0.0
        %1194 = vmatpush1.msra.mxu0 0.0
        %1195 = vmatprep.subr.mxu0 0.0
        %1196 = vmatpush1.msra.mxu0 0.0
        %1197 = vmatprep.subr.mxu0 0.0
        %1198 = vmatpush1.msra.mxu0 0.0
        %1199 = vmatprep.subr.mxu0 0.0
        %1200 = vmatpush1.msra.mxu0 0.0
        %1201 = vmatprep.subr.mxu0 0.0
        %1202 = vmatpush1.msra.mxu0 0.0
        %1203 = vmatprep.subr.mxu0 0.0
        %1204 = vmatpush1.msra.mxu0 0.0
        %1205 = vmatprep.subr.mxu0 0.0
        %1206 = vmatpush1.msra.mxu0 0.0
        %1207 = vmatprep.subr.mxu0 0.0
        %1208 = vmatpush1.msra.mxu0 0.0
        %1209 = vmatprep.mubr.f32.mxu0 0.0
        %v1210 = vand.u32 %v164, 4294901760
        %1211 = vmatmul.mubr.f32.gmra.mrb[0].mxu0 %v1210
        %v1212 = vpop.f32.mrb[0].mxu0
        %v1213 = vadd.f32 %v1051, %v1212
        %v1214 = vpop.f32.mrb[0].mxu0
        %1215 = vmatprep.mubr.f32.mxu0 0.0
        %v1216 = vand.u32 %v167, 4294901760
        %1217 = vmatmul.mubr.f32.gmra.mrb[0].mxu0 %v1216
        %v1218 = vpop.f32.mrb[0].mxu0
        %v1219 = vadd.f32 %v1057, %v1218
        %v1220 = vpop.f32.mrb[0].mxu0
        %1221 = vmatprep.mubr.f32.mxu0 0.0
        %v1222 = vand.u32 %v170, 4294901760
        %1223 = vmatmul.mubr.f32.gmra.mrb[0].mxu0 %v1222
        %v1224 = vpop.f32.mrb[0].mxu0
        %v1225 = vadd.f32 %v1063, %v1224
        %v1226 = vpop.f32.mrb[0].mxu0
        %1227 = vmatprep.mubr.f32.mxu0 0.0
        %v1228 = vand.u32 %v173, 4294901760
        %1229 = vmatmul.mubr.f32.gmra.mrb[0].mxu0 %v1228
        %v1230 = vpop.f32.mrb[0].mxu0
        %v1231 = vadd.f32 %v1069, %v1230
        %v1232 = vpop.f32.mrb[0].mxu0
        %1233 = vmatprep.mubr.f32.mxu0 0.0
        %v1234 = vand.u32 %v176, 4294901760
        %1235 = vmatmul.mubr.f32.gmra.mrb[0].mxu0 %v1234
        %v1236 = vpop.f32.mrb[0].mxu0
        %v1237 = vadd.f32 %v1075, %v1236
        %v1238 = vpop.f32.mrb[0].mxu0
        %1239 = vmatprep.mubr.f32.mxu0 0.0
        %v1240 = vand.u32 %v179, 4294901760
        %1241 = vmatmul.mubr.f32.gmra.mrb[0].mxu0 %v1240
        %v1242 = vpop.f32.mrb[0].mxu0
        %v1243 = vadd.f32 %v1081, %v1242
        %v1244 = vpop.f32.mrb[0].mxu0
        %1245 = vmatprep.mubr.f32.mxu0 0.0
        %v1246 = vand.u32 %v182, 4294901760
        %1247 = vmatmul.mubr.f32.gmra.mrb[0].mxu0 %v1246
        %v1248 = vpop.f32.mrb[0].mxu0
        %v1249 = vadd.f32 %v1087, %v1248
        %v1250 = vpop.f32.mrb[0].mxu0
        %1251 = vmatprep.mubr.f32.mxu0 0.0
        %v1252 = vand.u32 %v185, 4294901760
        %1253 = vmatmul.mubr.f32.gmra.mrb[0].mxu0 %v1252
        %v1254 = vpop.f32.mrb[0].mxu0
        %v1255 = vadd.f32 %v1093, %v1254
        %v1256 = vpop.f32.mrb[0].mxu0
        %1257 = vmatprep.mubr.f32.mxu0 0.0
        %v1258 = vand.u32 %v188, 4294901760
        %1259 = vmatmul.mubr.f32.gmra.mrb[0].mxu0 %v1258
        %v1260 = vpop.f32.mrb[0].mxu0
        %v1261 = vadd.f32 %v1099, %v1260
        %v1262 = vpop.f32.mrb[0].mxu0
        %1263 = vmatprep.mubr.f32.mxu0 0.0
        %v1264 = vand.u32 %v191, 4294901760
        %1265 = vmatmul.mubr.f32.gmra.mrb[0].mxu0 %v1264
        %v1266 = vpop.f32.mrb[0].mxu0
        %v1267 = vadd.f32 %v1105, %v1266
        %v1268 = vpop.f32.mrb[0].mxu0
        %1269 = vmatprep.mubr.f32.mxu0 0.0
        %v1270 = vand.u32 %v194, 4294901760
        %1271 = vmatmul.mubr.f32.gmra.mrb[0].mxu0 %v1270
        %v1272 = vpop.f32.mrb[0].mxu0
        %v1273 = vadd.f32 %v1111, %v1272
        %v1274 = vpop.f32.mrb[0].mxu0
        %1275 = vmatprep.mubr.f32.mxu0 0.0
        %v1276 = vand.u32 %v197, 4294901760
        %1277 = vmatmul.mubr.f32.gmra.mrb[0].mxu0 %v1276
        %v1278 = vpop.f32.mrb[0].mxu0
        %v1279 = vadd.f32 %v1117, %v1278
        %v1280 = vpop.f32.mrb[0].mxu0
        %1281 = vmatprep.mubr.f32.mxu0 0.0
        %v1282 = vand.u32 %v200, 4294901760
        %1283 = vmatmul.mubr.f32.gmra.mrb[0].mxu0 %v1282
        %v1284 = vpop.f32.mrb[0].mxu0
        %v1285 = vadd.f32 %v1123, %v1284
        %v1286 = vpop.f32.mrb[0].mxu0
        %1287 = vmatprep.mubr.f32.mxu0 0.0
        %v1288 = vand.u32 %v203, 4294901760
        %1289 = vmatmul.mubr.f32.gmra.mrb[0].mxu0 %v1288
        %v1290 = vpop.f32.mrb[0].mxu0
        %v1291 = vadd.f32 %v1129, %v1290
        %v1292 = vpop.f32.mrb[0].mxu0
        %1293 = vmatprep.mubr.f32.mxu0 0.0
        %v1294 = vand.u32 %v206, 4294901760
        %1295 = vmatmul.mubr.f32.gmra.mrb[0].mxu0 %v1294
        %v1296 = vpop.f32.mrb[0].mxu0
        %v1297 = vadd.f32 %v1135, %v1296
        %v1298 = vpop.f32.mrb[0].mxu0
        %1299 = vmatprep.mubr.f32.mxu0 0.0
        %v1300 = vand.u32 %v209, 4294901760
        %1301 = vmatmul.mubr.f32.gmra.mrb[0].mxu0 %v1300
        %v1302 = vpop.f32.mrb[0].mxu0
        %v1303 = vadd.f32 %v1141, %v1302
        %v1304 = vpop.f32.mrb[0].mxu0
        %1305 = vdwg.mxu0
        %v1306 = vand.u32 2147483647, %v1213
        %vm1307 = vcmp.le.f32.partialorder %v1306, 0.7853982
        %vm1308 = vcmp.lt.s32.totalorder %v1213, 0
        %v1309 = vand.u32 %v1213, 2139095040
        %v1310 = vshrl.u32 %v1309, 23
        %v1311 = vsub.s32 %v1310, 127
        %v1312 = vand.u32 2147483647, %v1213
        %v1313 = vand.u32 %v1312, 8388607
        %v1314 = vor.u32 %v1313, 8388608
        %v1315 = vsub.s32 0, %v1314
        %v1316 = vadd.s32 %v1311, 1
        %vm1317 = vcmp.gt.s32.totalorder %v1316, 0
        %v1318 = vsel %vm1317, %v1316, 0
        %v1319 = vshrl.u32 %v1318, 5
        %v1320 = vand.u32 %v1318, 31
        %v1321 = vsub.s32 32, %v1320
        %v1322 = vshrl.u32 683565275, %v1321
        %v1323 = vshll.u32 683565275, %v1320
        %v1324 = vshrl.u32 2475754826, %v1321
        %v1325 = vor.u32 %v1323, %v1324
        %v1326 = vshll.u32 2475754826, %v1320
        %v1327 = vshrl.u32 2131351028, %v1321
        %v1328 = vor.u32 %v1326, %v1327
        %v1329 = vshll.u32 2131351028, %v1320
        %v1330 = vshrl.u32 2102212464, %v1321
        %v1331 = vor.u32 %v1329, %v1330
        %v1332 = vshll.u32 2102212464, %v1320
        %v1333 = vshrl.u32 920167782, %v1321
        %v1334 = vor.u32 %v1332, %v1333
        %v1335 = vshll.u32 920167782, %v1320
        %v1336 = vshrl.u32 1326507024, %v1321
        %v1337 = vor.u32 %v1335, %v1336
        %vm1338 = vcmp.lt.s32.totalorder %v1319, 1
        %vm1339 = vcmp.lt.s32.totalorder %v1319, 2
        %vm1340 = vcmp.lt.s32.totalorder %v1319, 3
        %vm1341 = vcmp.lt.s32.totalorder %v1319, 4
        %v1342 = vsel %vm1338, %v1322, %v1325
        %v1343 = vsel %vm1341, %v1331, 2102212464
        %v1344 = vsel %vm1340, %v1328, %v1343
        %v1345 = vsel %vm1339, %v1342, %v1344
        %v1346 = vsel %vm1338, %v1325, %v1328
        %v1347 = vsel %vm1341, %v1334, 920167782
        %v1348 = vsel %vm1340, %v1331, %v1347
        %v1349 = vsel %vm1339, %v1346, %v1348
        %v1350 = vsel %vm1338, %v1328, %v1331
        %v1351 = vsel %vm1341, %v1337, 1326507024
        %v1352 = vsel %vm1340, %v1334, %v1351
        %v1353 = vsel %vm1339, %v1350, %v1352
        %v1354 = vshll.u32 %v1314, 8
        %v1355 = vmul.u32.u64.compose %v1354, %v1353
        %v1356 = vextract.low.u32 %v1355
        %v1357 = vextract.high.u32 %v1355
        %v1358 = vmul.u32.u64.compose %v1354, %v1349
        %v1359 = vextract.low.u32 %v1358
        %v1360 = vextract.high.u32 %v1358
        %v1361 = vmul.u32 %v1354, %v1345
        %v1362 = vadd.s32 %v1357, %v1359
        %vm1363 = vc.u32 %v1357, %v1359
        %v1364 = vadd.s32 %v1360, 1
        %v1365 = vsel %vm1363, %v1364, %v1360
        %v1366 = vadd.s32 %v1361, %v1365
        %v1367 = vadd.s32 %v1366, 536870912
        %v1368 = vshrl.u32 %v1367, 30
        %v1369 = vshll.u32 %v1368, 30
        %v1370 = vsub.s32 %v1366, %v1369
        %vm1371 = vcmp.lt.s32.totalorder %v1370, 0
        %v1372 = vsub.s32 0, %v1370
        %v1373 = vsel %vm1371, %v1372, %v1370
        %v1374 = vclz %v1373
        %v1375 = vsub.s32 %v1374, 2
        %vm1376 = vcmp.gt.s32.totalorder 0, %v1375
        %v1377 = vsel %vm1376, 0, %v1375
        %v1378 = vsub.s32 32, %v1377
        %v1379 = vshll.u32 %v1370, %v1377
        %v1380 = vshrl.u32 %v1362, %v1378
        %v1381 = vor.u32 %v1379, %v1380
        %v1382 = vsub.s32 4294967266, %v1377
        %v1383 = vadd.s32 %v1382, 127
        %v1384 = vshll.u32 %v1383, 23
        %v1385 = vor.u32 4788187, %v1384
        %v1386 = vand.u32 2147483647, %v1385
        %v1388 = vcvt.s32.f32 %v1381
        %v1389 = vmul.f32 %v1388, %v1386
        %v1390 = vxor.u32 %v1389, 2147483648
        %v1391 = vsel %vm1308, %v1390, %v1389
        %v1392 = vsub.s32 4, %v1368
        %v1393 = vsel %vm1308, %v1392, %v1368
        %v1394 = vsel %vm1307, %v1213, %v1391
        %v1395 = vsel %vm1307, 0, %v1393
        %v1396 = vcosq.f32.pop %v1394
        %v1397 = vsinq.f32.pop %v1394
        %vm1398 = vweird.f32 %v1213
        %v1399 = vadd.s32 %v1395, 3
        %v1400 = vand.u32 %v1399, 3
        %vm1401 = vcmp.lt.s32.totalorder %v1400, 2
        %vm1402 = vcmp.eq.s32.totalorder %v1400, 0
        %v1403 = vxor.u32 %v1397, 2147483648
        %v1404 = vsel %vm1402, %v1396, %v1403
        %vm1405 = vcmp.eq.s32.totalorder %v1400, 2
        %v1406 = vxor.u32 %v1396, 2147483648
        %v1407 = vsel %vm1405, %v1406, %v1397
        %v1408 = vsel %vm1401, %v1404, %v1407
        %v1409 = vsel %vm1398, nan, %v1408
        %v1410 = vand.u32 2147483647, %v1219
        %vm1411 = vcmp.le.f32.partialorder %v1410, 0.7853982
        %vm1412 = vcmp.lt.s32.totalorder %v1219, 0
        %v1413 = vand.u32 %v1219, 2139095040
        %v1414 = vshrl.u32 %v1413, 23
        %v1415 = vsub.s32 %v1414, 127
        %v1416 = vand.u32 2147483647, %v1219
        %v1417 = vand.u32 %v1416, 8388607
        %v1418 = vor.u32 %v1417, 8388608
        %v1419 = vsub.s32 0, %v1418
        %v1420 = vadd.s32 %v1415, 1
        %vm1421 = vcmp.gt.s32.totalorder %v1420, 0
        %v1422 = vsel %vm1421, %v1420, 0
        %v1423 = vshrl.u32 %v1422, 5
        %v1424 = vand.u32 %v1422, 31
        %v1425 = vsub.s32 32, %v1424
        %v1426 = vshrl.u32 683565275, %v1425
        %v1427 = vshll.u32 683565275, %v1424
        %v1428 = vshrl.u32 2475754826, %v1425
        %v1429 = vor.u32 %v1427, %v1428
        %v1430 = vshll.u32 2475754826, %v1424
        %v1431 = vshrl.u32 2131351028, %v1425
        %v1432 = vor.u32 %v1430, %v1431
        %v1433 = vshll.u32 2131351028, %v1424
        %v1434 = vshrl.u32 2102212464, %v1425
        %v1435 = vor.u32 %v1433, %v1434
        %v1436 = vshll.u32 2102212464, %v1424
        %v1437 = vshrl.u32 920167782, %v1425
        %v1438 = vor.u32 %v1436, %v1437
        %v1439 = vshll.u32 920167782, %v1424
        %v1440 = vshrl.u32 1326507024, %v1425
        %v1441 = vor.u32 %v1439, %v1440
        %vm1442 = vcmp.lt.s32.totalorder %v1423, 1
        %vm1443 = vcmp.lt.s32.totalorder %v1423, 2
        %vm1444 = vcmp.lt.s32.totalorder %v1423, 3
        %vm1445 = vcmp.lt.s32.totalorder %v1423, 4
        %v1446 = vsel %vm1442, %v1426, %v1429
        %v1447 = vsel %vm1445, %v1435, 2102212464
        %v1448 = vsel %vm1444, %v1432, %v1447
        %v1449 = vsel %vm1443, %v1446, %v1448
        %v1450 = vsel %vm1442, %v1429, %v1432
        %v1451 = vsel %vm1445, %v1438, 920167782
        %v1452 = vsel %vm1444, %v1435, %v1451
        %v1453 = vsel %vm1443, %v1450, %v1452
        %v1454 = vsel %vm1442, %v1432, %v1435
        %v1455 = vsel %vm1445, %v1441, 1326507024
        %v1456 = vsel %vm1444, %v1438, %v1455
        %v1457 = vsel %vm1443, %v1454, %v1456
        %v1458 = vshll.u32 %v1418, 8
        %v1459 = vmul.u32.u64.compose %v1458, %v1457
        %v1460 = vextract.low.u32 %v1459
        %v1461 = vextract.high.u32 %v1459
        %v1462 = vmul.u32.u64.compose %v1458, %v1453
        %v1463 = vextract.low.u32 %v1462
        %v1464 = vextract.high.u32 %v1462
        %v1465 = vmul.u32 %v1458, %v1449
        %v1466 = vadd.s32 %v1461, %v1463
        %vm1467 = vc.u32 %v1461, %v1463
        %v1468 = vadd.s32 %v1464, 1
        %v1469 = vsel %vm1467, %v1468, %v1464
        %v1470 = vadd.s32 %v1465, %v1469
        %v1471 = vadd.s32 %v1470, 536870912
        %v1472 = vshrl.u32 %v1471, 30
        %v1473 = vshll.u32 %v1472, 30
        %v1474 = vsub.s32 %v1470, %v1473
        %vm1475 = vcmp.lt.s32.totalorder %v1474, 0
        %v1476 = vsub.s32 0, %v1474
        %v1477 = vsel %vm1475, %v1476, %v1474
        %v1478 = vclz %v1477
        %v1479 = vsub.s32 %v1478, 2
        %vm1480 = vcmp.gt.s32.totalorder 0, %v1479
        %v1481 = vsel %vm1480, 0, %v1479
        %v1482 = vsub.s32 32, %v1481
        %v1483 = vshll.u32 %v1474, %v1481
        %v1484 = vshrl.u32 %v1466, %v1482
        %v1485 = vor.u32 %v1483, %v1484
        %v1486 = vsub.s32 4294967266, %v1481
        %v1487 = vadd.s32 %v1486, 127
        %v1488 = vshll.u32 %v1487, 23
        %v1489 = vor.u32 4788187, %v1488
        %v1490 = vand.u32 2147483647, %v1489
        %v1492 = vcvt.s32.f32 %v1485
        %v1493 = vmul.f32 %v1492, %v1490
        %v1494 = vxor.u32 %v1493, 2147483648
        %v1495 = vsel %vm1412, %v1494, %v1493
        %v1496 = vsub.s32 4, %v1472
        %v1497 = vsel %vm1412, %v1496, %v1472
        %v1498 = vsel %vm1411, %v1219, %v1495
        %v1499 = vsel %vm1411, 0, %v1497
        %v1500 = vcosq.f32.pop %v1498
        %v1501 = vsinq.f32.pop %v1498
        %vm1502 = vweird.f32 %v1219
        %v1503 = vadd.s32 %v1499, 3
        %v1504 = vand.u32 %v1503, 3
        %vm1505 = vcmp.lt.s32.totalorder %v1504, 2
        %vm1506 = vcmp.eq.s32.totalorder %v1504, 0
        %v1507 = vxor.u32 %v1501, 2147483648
        %v1508 = vsel %vm1506, %v1500, %v1507
        %vm1509 = vcmp.eq.s32.totalorder %v1504, 2
        %v1510 = vxor.u32 %v1500, 2147483648
        %v1511 = vsel %vm1509, %v1510, %v1501
        %v1512 = vsel %vm1505, %v1508, %v1511
        %v1513 = vsel %vm1502, nan, %v1512
        %v1514 = vand.u32 2147483647, %v1225
        %vm1515 = vcmp.le.f32.partialorder %v1514, 0.7853982
        %vm1516 = vcmp.lt.s32.totalorder %v1225, 0
        %v1517 = vand.u32 %v1225, 2139095040
        %v1518 = vshrl.u32 %v1517, 23
        %v1519 = vsub.s32 %v1518, 127
        %v1520 = vand.u32 2147483647, %v1225
        %v1521 = vand.u32 %v1520, 8388607
        %v1522 = vor.u32 %v1521, 8388608
        %v1523 = vsub.s32 0, %v1522
        %v1524 = vadd.s32 %v1519, 1
        %vm1525 = vcmp.gt.s32.totalorder %v1524, 0
        %v1526 = vsel %vm1525, %v1524, 0
        %v1527 = vshrl.u32 %v1526, 5
        %v1528 = vand.u32 %v1526, 31
        %v1529 = vsub.s32 32, %v1528
        %v1530 = vshrl.u32 683565275, %v1529
        %v1531 = vshll.u32 683565275, %v1528
        %v1532 = vshrl.u32 2475754826, %v1529
        %v1533 = vor.u32 %v1531, %v1532
        %v1534 = vshll.u32 2475754826, %v1528
        %v1535 = vshrl.u32 2131351028, %v1529
        %v1536 = vor.u32 %v1534, %v1535
        %v1537 = vshll.u32 2131351028, %v1528
        %v1538 = vshrl.u32 2102212464, %v1529
        %v1539 = vor.u32 %v1537, %v1538
        %v1540 = vshll.u32 2102212464, %v1528
        %v1541 = vshrl.u32 920167782, %v1529
        %v1542 = vor.u32 %v1540, %v1541
        %v1543 = vshll.u32 920167782, %v1528
        %v1544 = vshrl.u32 1326507024, %v1529
        %v1545 = vor.u32 %v1543, %v1544
        %vm1546 = vcmp.lt.s32.totalorder %v1527, 1
        %vm1547 = vcmp.lt.s32.totalorder %v1527, 2
        %vm1548 = vcmp.lt.s32.totalorder %v1527, 3
        %vm1549 = vcmp.lt.s32.totalorder %v1527, 4
        %v1550 = vsel %vm1546, %v1530, %v1533
        %v1551 = vsel %vm1549, %v1539, 2102212464
        %v1552 = vsel %vm1548, %v1536, %v1551
        %v1553 = vsel %vm1547, %v1550, %v1552
        %v1554 = vsel %vm1546, %v1533, %v1536
        %v1555 = vsel %vm1549, %v1542, 920167782
        %v1556 = vsel %vm1548, %v1539, %v1555
        %v1557 = vsel %vm1547, %v1554, %v1556
        %v1558 = vsel %vm1546, %v1536, %v1539
        %v1559 = vsel %vm1549, %v1545, 1326507024
        %v1560 = vsel %vm1548, %v1542, %v1559
        %v1561 = vsel %vm1547, %v1558, %v1560
        %v1562 = vshll.u32 %v1522, 8
        %v1563 = vmul.u32.u64.compose %v1562, %v1561
        %v1564 = vextract.low.u32 %v1563
        %v1565 = vextract.high.u32 %v1563
        %v1566 = vmul.u32.u64.compose %v1562, %v1557
        %v1567 = vextract.low.u32 %v1566
        %v1568 = vextract.high.u32 %v1566
        %v1569 = vmul.u32 %v1562, %v1553
        %v1570 = vadd.s32 %v1565, %v1567
        %vm1571 = vc.u32 %v1565, %v1567
        %v1572 = vadd.s32 %v1568, 1
        %v1573 = vsel %vm1571, %v1572, %v1568
        %v1574 = vadd.s32 %v1569, %v1573
        %v1575 = vadd.s32 %v1574, 536870912
        %v1576 = vshrl.u32 %v1575, 30
        %v1577 = vshll.u32 %v1576, 30
        %v1578 = vsub.s32 %v1574, %v1577
        %vm1579 = vcmp.lt.s32.totalorder %v1578, 0
        %v1580 = vsub.s32 0, %v1578
        %v1581 = vsel %vm1579, %v1580, %v1578
        %v1582 = vclz %v1581
        %v1583 = vsub.s32 %v1582, 2
        %vm1584 = vcmp.gt.s32.totalorder 0, %v1583
        %v1585 = vsel %vm1584, 0, %v1583
        %v1586 = vsub.s32 32, %v1585
        %v1587 = vshll.u32 %v1578, %v1585
        %v1588 = vshrl.u32 %v1570, %v1586
        %v1589 = vor.u32 %v1587, %v1588
        %v1590 = vsub.s32 4294967266, %v1585
        %v1591 = vadd.s32 %v1590, 127
        %v1592 = vshll.u32 %v1591, 23
        %v1593 = vor.u32 4788187, %v1592
        %v1594 = vand.u32 2147483647, %v1593
        %v1596 = vcvt.s32.f32 %v1589
        %v1597 = vmul.f32 %v1596, %v1594
        %v1598 = vxor.u32 %v1597, 2147483648
        %v1599 = vsel %vm1516, %v1598, %v1597
        %v1600 = vsub.s32 4, %v1576
        %v1601 = vsel %vm1516, %v1600, %v1576
        %v1602 = vsel %vm1515, %v1225, %v1599
        %v1603 = vsel %vm1515, 0, %v1601
        %v1604 = vcosq.f32.pop %v1602
        %v1605 = vsinq.f32.pop %v1602
        %vm1606 = vweird.f32 %v1225
        %v1607 = vadd.s32 %v1603, 3
        %v1608 = vand.u32 %v1607, 3
        %vm1609 = vcmp.lt.s32.totalorder %v1608, 2
        %vm1610 = vcmp.eq.s32.totalorder %v1608, 0
        %v1611 = vxor.u32 %v1605, 2147483648
        %v1612 = vsel %vm1610, %v1604, %v1611
        %vm1613 = vcmp.eq.s32.totalorder %v1608, 2
        %v1614 = vxor.u32 %v1604, 2147483648
        %v1615 = vsel %vm1613, %v1614, %v1605
        %v1616 = vsel %vm1609, %v1612, %v1615
        %v1617 = vsel %vm1606, nan, %v1616
        %v1618 = vand.u32 2147483647, %v1231
        %vm1619 = vcmp.le.f32.partialorder %v1618, 0.7853982
        %vm1620 = vcmp.lt.s32.totalorder %v1231, 0
        %v1621 = vand.u32 %v1231, 2139095040
        %v1622 = vshrl.u32 %v1621, 23
        %v1623 = vsub.s32 %v1622, 127
        %v1624 = vand.u32 2147483647, %v1231
        %v1625 = vand.u32 %v1624, 8388607
        %v1626 = vor.u32 %v1625, 8388608
        %v1627 = vsub.s32 0, %v1626
        %v1628 = vadd.s32 %v1623, 1
        %vm1629 = vcmp.gt.s32.totalorder %v1628, 0
        %v1630 = vsel %vm1629, %v1628, 0
        %v1631 = vshrl.u32 %v1630, 5
        %v1632 = vand.u32 %v1630, 31
        %v1633 = vsub.s32 32, %v1632
        %v1634 = vshrl.u32 683565275, %v1633
        %v1635 = vshll.u32 683565275, %v1632
        %v1636 = vshrl.u32 2475754826, %v1633
        %v1637 = vor.u32 %v1635, %v1636
        %v1638 = vshll.u32 2475754826, %v1632
        %v1639 = vshrl.u32 2131351028, %v1633
        %v1640 = vor.u32 %v1638, %v1639
        %v1641 = vshll.u32 2131351028, %v1632
        %v1642 = vshrl.u32 2102212464, %v1633
        %v1643 = vor.u32 %v1641, %v1642
        %v1644 = vshll.u32 2102212464, %v1632
        %v1645 = vshrl.u32 920167782, %v1633
        %v1646 = vor.u32 %v1644, %v1645
        %v1647 = vshll.u32 920167782, %v1632
        %v1648 = vshrl.u32 1326507024, %v1633
        %v1649 = vor.u32 %v1647, %v1648
        %vm1650 = vcmp.lt.s32.totalorder %v1631, 1
        %vm1651 = vcmp.lt.s32.totalorder %v1631, 2
        %vm1652 = vcmp.lt.s32.totalorder %v1631, 3
        %vm1653 = vcmp.lt.s32.totalorder %v1631, 4
        %v1654 = vsel %vm1650, %v1634, %v1637
        %v1655 = vsel %vm1653, %v1643, 2102212464
        %v1656 = vsel %vm1652, %v1640, %v1655
        %v1657 = vsel %vm1651, %v1654, %v1656
        %v1658 = vsel %vm1650, %v1637, %v1640
        %v1659 = vsel %vm1653, %v1646, 920167782
        %v1660 = vsel %vm1652, %v1643, %v1659
        %v1661 = vsel %vm1651, %v1658, %v1660
        %v1662 = vsel %vm1650, %v1640, %v1643
        %v1663 = vsel %vm1653, %v1649, 1326507024
        %v1664 = vsel %vm1652, %v1646, %v1663
        %v1665 = vsel %vm1651, %v1662, %v1664
        %v1666 = vshll.u32 %v1626, 8
        %v1667 = vmul.u32.u64.compose %v1666, %v1665
        %v1668 = vextract.low.u32 %v1667
        %v1669 = vextract.high.u32 %v1667
        %v1670 = vmul.u32.u64.compose %v1666, %v1661
        %v1671 = vextract.low.u32 %v1670
        %v1672 = vextract.high.u32 %v1670
        %v1673 = vmul.u32 %v1666, %v1657
        %v1674 = vadd.s32 %v1669, %v1671
        %vm1675 = vc.u32 %v1669, %v1671
        %v1676 = vadd.s32 %v1672, 1
        %v1677 = vsel %vm1675, %v1676, %v1672
        %v1678 = vadd.s32 %v1673, %v1677
        %v1679 = vadd.s32 %v1678, 536870912
        %v1680 = vshrl.u32 %v1679, 30
        %v1681 = vshll.u32 %v1680, 30
        %v1682 = vsub.s32 %v1678, %v1681
        %vm1683 = vcmp.lt.s32.totalorder %v1682, 0
        %v1684 = vsub.s32 0, %v1682
        %v1685 = vsel %vm1683, %v1684, %v1682
        %v1686 = vclz %v1685
        %v1687 = vsub.s32 %v1686, 2
        %vm1688 = vcmp.gt.s32.totalorder 0, %v1687
        %v1689 = vsel %vm1688, 0, %v1687
        %v1690 = vsub.s32 32, %v1689
        %v1691 = vshll.u32 %v1682, %v1689
        %v1692 = vshrl.u32 %v1674, %v1690
        %v1693 = vor.u32 %v1691, %v1692
        %v1694 = vsub.s32 4294967266, %v1689
        %v1695 = vadd.s32 %v1694, 127
        %v1696 = vshll.u32 %v1695, 23
        %v1697 = vor.u32 4788187, %v1696
        %v1698 = vand.u32 2147483647, %v1697
        %v1700 = vcvt.s32.f32 %v1693
        %v1701 = vmul.f32 %v1700, %v1698
        %v1702 = vxor.u32 %v1701, 2147483648
        %v1703 = vsel %vm1620, %v1702, %v1701
        %v1704 = vsub.s32 4, %v1680
        %v1705 = vsel %vm1620, %v1704, %v1680
        %v1706 = vsel %vm1619, %v1231, %v1703
        %v1707 = vsel %vm1619, 0, %v1705
        %v1708 = vcosq.f32.pop %v1706
        %v1709 = vsinq.f32.pop %v1706
        %vm1710 = vweird.f32 %v1231
        %v1711 = vadd.s32 %v1707, 3
        %v1712 = vand.u32 %v1711, 3
        %vm1713 = vcmp.lt.s32.totalorder %v1712, 2
        %vm1714 = vcmp.eq.s32.totalorder %v1712, 0
        %v1715 = vxor.u32 %v1709, 2147483648
        %v1716 = vsel %vm1714, %v1708, %v1715
        %vm1717 = vcmp.eq.s32.totalorder %v1712, 2
        %v1718 = vxor.u32 %v1708, 2147483648
        %v1719 = vsel %vm1717, %v1718, %v1709
        %v1720 = vsel %vm1713, %v1716, %v1719
        %v1721 = vsel %vm1710, nan, %v1720
        %v1722 = vand.u32 2147483647, %v1237
        %vm1723 = vcmp.le.f32.partialorder %v1722, 0.7853982
        %vm1724 = vcmp.lt.s32.totalorder %v1237, 0
        %v1725 = vand.u32 %v1237, 2139095040
        %v1726 = vshrl.u32 %v1725, 23
        %v1727 = vsub.s32 %v1726, 127
        %v1728 = vand.u32 2147483647, %v1237
        %v1729 = vand.u32 %v1728, 8388607
        %v1730 = vor.u32 %v1729, 8388608
        %v1731 = vsub.s32 0, %v1730
        %v1732 = vadd.s32 %v1727, 1
        %vm1733 = vcmp.gt.s32.totalorder %v1732, 0
        %v1734 = vsel %vm1733, %v1732, 0
        %v1735 = vshrl.u32 %v1734, 5
        %v1736 = vand.u32 %v1734, 31
        %v1737 = vsub.s32 32, %v1736
        %v1738 = vshrl.u32 683565275, %v1737
        %v1739 = vshll.u32 683565275, %v1736
        %v1740 = vshrl.u32 2475754826, %v1737
        %v1741 = vor.u32 %v1739, %v1740
        %v1742 = vshll.u32 2475754826, %v1736
        %v1743 = vshrl.u32 2131351028, %v1737
        %v1744 = vor.u32 %v1742, %v1743
        %v1745 = vshll.u32 2131351028, %v1736
        %v1746 = vshrl.u32 2102212464, %v1737
        %v1747 = vor.u32 %v1745, %v1746
        %v1748 = vshll.u32 2102212464, %v1736
        %v1749 = vshrl.u32 920167782, %v1737
        %v1750 = vor.u32 %v1748, %v1749
        %v1751 = vshll.u32 920167782, %v1736
        %v1752 = vshrl.u32 1326507024, %v1737
        %v1753 = vor.u32 %v1751, %v1752
        %vm1754 = vcmp.lt.s32.totalorder %v1735, 1
        %vm1755 = vcmp.lt.s32.totalorder %v1735, 2
        %vm1756 = vcmp.lt.s32.totalorder %v1735, 3
        %vm1757 = vcmp.lt.s32.totalorder %v1735, 4
        %v1758 = vsel %vm1754, %v1738, %v1741
        %v1759 = vsel %vm1757, %v1747, 2102212464
        %v1760 = vsel %vm1756, %v1744, %v1759
        %v1761 = vsel %vm1755, %v1758, %v1760
        %v1762 = vsel %vm1754, %v1741, %v1744
        %v1763 = vsel %vm1757, %v1750, 920167782
        %v1764 = vsel %vm1756, %v1747, %v1763
        %v1765 = vsel %vm1755, %v1762, %v1764
        %v1766 = vsel %vm1754, %v1744, %v1747
        %v1767 = vsel %vm1757, %v1753, 1326507024
        %v1768 = vsel %vm1756, %v1750, %v1767
        %v1769 = vsel %vm1755, %v1766, %v1768
        %v1770 = vshll.u32 %v1730, 8
        %v1771 = vmul.u32.u64.compose %v1770, %v1769
        %v1772 = vextract.low.u32 %v1771
        %v1773 = vextract.high.u32 %v1771
        %v1774 = vmul.u32.u64.compose %v1770, %v1765
        %v1775 = vextract.low.u32 %v1774
        %v1776 = vextract.high.u32 %v1774
        %v1777 = vmul.u32 %v1770, %v1761
        %v1778 = vadd.s32 %v1773, %v1775
        %vm1779 = vc.u32 %v1773, %v1775
        %v1780 = vadd.s32 %v1776, 1
        %v1781 = vsel %vm1779, %v1780, %v1776
        %v1782 = vadd.s32 %v1777, %v1781
        %v1783 = vadd.s32 %v1782, 536870912
        %v1784 = vshrl.u32 %v1783, 30
        %v1785 = vshll.u32 %v1784, 30
        %v1786 = vsub.s32 %v1782, %v1785
        %vm1787 = vcmp.lt.s32.totalorder %v1786, 0
        %v1788 = vsub.s32 0, %v1786
        %v1789 = vsel %vm1787, %v1788, %v1786
        %v1790 = vclz %v1789
        %v1791 = vsub.s32 %v1790, 2
        %vm1792 = vcmp.gt.s32.totalorder 0, %v1791
        %v1793 = vsel %vm1792, 0, %v1791
        %v1794 = vsub.s32 32, %v1793
        %v1795 = vshll.u32 %v1786, %v1793
        %v1796 = vshrl.u32 %v1778, %v1794
        %v1797 = vor.u32 %v1795, %v1796
        %v1798 = vsub.s32 4294967266, %v1793
        %v1799 = vadd.s32 %v1798, 127
        %v1800 = vshll.u32 %v1799, 23
        %v1801 = vor.u32 4788187, %v1800
        %v1802 = vand.u32 2147483647, %v1801
        %v1804 = vcvt.s32.f32 %v1797
        %v1805 = vmul.f32 %v1804, %v1802
        %v1806 = vxor.u32 %v1805, 2147483648
        %v1807 = vsel %vm1724, %v1806, %v1805
        %v1808 = vsub.s32 4, %v1784
        %v1809 = vsel %vm1724, %v1808, %v1784
        %v1810 = vsel %vm1723, %v1237, %v1807
        %v1811 = vsel %vm1723, 0, %v1809
        %v1812 = vcosq.f32.pop %v1810
        %v1813 = vsinq.f32.pop %v1810
        %vm1814 = vweird.f32 %v1237
        %v1815 = vadd.s32 %v1811, 3
        %v1816 = vand.u32 %v1815, 3
        %vm1817 = vcmp.lt.s32.totalorder %v1816, 2
        %vm1818 = vcmp.eq.s32.totalorder %v1816, 0
        %v1819 = vxor.u32 %v1813, 2147483648
        %v1820 = vsel %vm1818, %v1812, %v1819
        %vm1821 = vcmp.eq.s32.totalorder %v1816, 2
        %v1822 = vxor.u32 %v1812, 2147483648
        %v1823 = vsel %vm1821, %v1822, %v1813
        %v1824 = vsel %vm1817, %v1820, %v1823
        %v1825 = vsel %vm1814, nan, %v1824
        %v1826 = vand.u32 2147483647, %v1243
        %vm1827 = vcmp.le.f32.partialorder %v1826, 0.7853982
        %vm1828 = vcmp.lt.s32.totalorder %v1243, 0
        %v1829 = vand.u32 %v1243, 2139095040
        %v1830 = vshrl.u32 %v1829, 23
        %v1831 = vsub.s32 %v1830, 127
        %v1832 = vand.u32 2147483647, %v1243
        %v1833 = vand.u32 %v1832, 8388607
        %v1834 = vor.u32 %v1833, 8388608
        %v1835 = vsub.s32 0, %v1834
        %v1836 = vadd.s32 %v1831, 1
        %vm1837 = vcmp.gt.s32.totalorder %v1836, 0
        %v1838 = vsel %vm1837, %v1836, 0
        %v1839 = vshrl.u32 %v1838, 5
        %v1840 = vand.u32 %v1838, 31
        %v1841 = vsub.s32 32, %v1840
        %v1842 = vshrl.u32 683565275, %v1841
        %v1843 = vshll.u32 683565275, %v1840
        %v1844 = vshrl.u32 2475754826, %v1841
        %v1845 = vor.u32 %v1843, %v1844
        %v1846 = vshll.u32 2475754826, %v1840
        %v1847 = vshrl.u32 2131351028, %v1841
        %v1848 = vor.u32 %v1846, %v1847
        %v1849 = vshll.u32 2131351028, %v1840
        %v1850 = vshrl.u32 2102212464, %v1841
        %v1851 = vor.u32 %v1849, %v1850
        %v1852 = vshll.u32 2102212464, %v1840
        %v1853 = vshrl.u32 920167782, %v1841
        %v1854 = vor.u32 %v1852, %v1853
        %v1855 = vshll.u32 920167782, %v1840
        %v1856 = vshrl.u32 1326507024, %v1841
        %v1857 = vor.u32 %v1855, %v1856
        %vm1858 = vcmp.lt.s32.totalorder %v1839, 1
        %vm1859 = vcmp.lt.s32.totalorder %v1839, 2
        %vm1860 = vcmp.lt.s32.totalorder %v1839, 3
        %vm1861 = vcmp.lt.s32.totalorder %v1839, 4
        %v1862 = vsel %vm1858, %v1842, %v1845
        %v1863 = vsel %vm1861, %v1851, 2102212464
        %v1864 = vsel %vm1860, %v1848, %v1863
        %v1865 = vsel %vm1859, %v1862, %v1864
        %v1866 = vsel %vm1858, %v1845, %v1848
        %v1867 = vsel %vm1861, %v1854, 920167782
        %v1868 = vsel %vm1860, %v1851, %v1867
        %v1869 = vsel %vm1859, %v1866, %v1868
        %v1870 = vsel %vm1858, %v1848, %v1851
        %v1871 = vsel %vm1861, %v1857, 1326507024
        %v1872 = vsel %vm1860, %v1854, %v1871
        %v1873 = vsel %vm1859, %v1870, %v1872
        %v1874 = vshll.u32 %v1834, 8
        %v1875 = vmul.u32.u64.compose %v1874, %v1873
        %v1876 = vextract.low.u32 %v1875
        %v1877 = vextract.high.u32 %v1875
        %v1878 = vmul.u32.u64.compose %v1874, %v1869
        %v1879 = vextract.low.u32 %v1878
        %v1880 = vextract.high.u32 %v1878
        %v1881 = vmul.u32 %v1874, %v1865
        %v1882 = vadd.s32 %v1877, %v1879
        %vm1883 = vc.u32 %v1877, %v1879
        %v1884 = vadd.s32 %v1880, 1
        %v1885 = vsel %vm1883, %v1884, %v1880
        %v1886 = vadd.s32 %v1881, %v1885
        %v1887 = vadd.s32 %v1886, 536870912
        %v1888 = vshrl.u32 %v1887, 30
        %v1889 = vshll.u32 %v1888, 30
        %v1890 = vsub.s32 %v1886, %v1889
        %vm1891 = vcmp.lt.s32.totalorder %v1890, 0
        %v1892 = vsub.s32 0, %v1890
        %v1893 = vsel %vm1891, %v1892, %v1890
        %v1894 = vclz %v1893
        %v1895 = vsub.s32 %v1894, 2
        %vm1896 = vcmp.gt.s32.totalorder 0, %v1895
        %v1897 = vsel %vm1896, 0, %v1895
        %v1898 = vsub.s32 32, %v1897
        %v1899 = vshll.u32 %v1890, %v1897
        %v1900 = vshrl.u32 %v1882, %v1898
        %v1901 = vor.u32 %v1899, %v1900
        %v1902 = vsub.s32 4294967266, %v1897
        %v1903 = vadd.s32 %v1902, 127
        %v1904 = vshll.u32 %v1903, 23
        %v1905 = vor.u32 4788187, %v1904
        %v1906 = vand.u32 2147483647, %v1905
        %v1908 = vcvt.s32.f32 %v1901
        %v1909 = vmul.f32 %v1908, %v1906
        %v1910 = vxor.u32 %v1909, 2147483648
        %v1911 = vsel %vm1828, %v1910, %v1909
        %v1912 = vsub.s32 4, %v1888
        %v1913 = vsel %vm1828, %v1912, %v1888
        %v1914 = vsel %vm1827, %v1243, %v1911
        %v1915 = vsel %vm1827, 0, %v1913
        %v1916 = vcosq.f32.pop %v1914
        %v1917 = vsinq.f32.pop %v1914
        %vm1918 = vweird.f32 %v1243
        %v1919 = vadd.s32 %v1915, 3
        %v1920 = vand.u32 %v1919, 3
        %vm1921 = vcmp.lt.s32.totalorder %v1920, 2
        %vm1922 = vcmp.eq.s32.totalorder %v1920, 0
        %v1923 = vxor.u32 %v1917, 2147483648
        %v1924 = vsel %vm1922, %v1916, %v1923
        %vm1925 = vcmp.eq.s32.totalorder %v1920, 2
        %v1926 = vxor.u32 %v1916, 2147483648
        %v1927 = vsel %vm1925, %v1926, %v1917
        %v1928 = vsel %vm1921, %v1924, %v1927
        %v1929 = vsel %vm1918, nan, %v1928
        %v1930 = vand.u32 2147483647, %v1249
        %vm1931 = vcmp.le.f32.partialorder %v1930, 0.7853982
        %vm1932 = vcmp.lt.s32.totalorder %v1249, 0
        %v1933 = vand.u32 %v1249, 2139095040
        %v1934 = vshrl.u32 %v1933, 23
        %v1935 = vsub.s32 %v1934, 127
        %v1936 = vand.u32 2147483647, %v1249
        %v1937 = vand.u32 %v1936, 8388607
        %v1938 = vor.u32 %v1937, 8388608
        %v1939 = vsub.s32 0, %v1938
        %v1940 = vadd.s32 %v1935, 1
        %vm1941 = vcmp.gt.s32.totalorder %v1940, 0
        %v1942 = vsel %vm1941, %v1940, 0
        %v1943 = vshrl.u32 %v1942, 5
        %v1944 = vand.u32 %v1942, 31
        %v1945 = vsub.s32 32, %v1944
        %v1946 = vshrl.u32 683565275, %v1945
        %v1947 = vshll.u32 683565275, %v1944
        %v1948 = vshrl.u32 2475754826, %v1945
        %v1949 = vor.u32 %v1947, %v1948
        %v1950 = vshll.u32 2475754826, %v1944
        %v1951 = vshrl.u32 2131351028, %v1945
        %v1952 = vor.u32 %v1950, %v1951
        %v1953 = vshll.u32 2131351028, %v1944
        %v1954 = vshrl.u32 2102212464, %v1945
        %v1955 = vor.u32 %v1953, %v1954
        %v1956 = vshll.u32 2102212464, %v1944
        %v1957 = vshrl.u32 920167782, %v1945
        %v1958 = vor.u32 %v1956, %v1957
        %v1959 = vshll.u32 920167782, %v1944
        %v1960 = vshrl.u32 1326507024, %v1945
        %v1961 = vor.u32 %v1959, %v1960
        %vm1962 = vcmp.lt.s32.totalorder %v1943, 1
        %vm1963 = vcmp.lt.s32.totalorder %v1943, 2
        %vm1964 = vcmp.lt.s32.totalorder %v1943, 3
        %vm1965 = vcmp.lt.s32.totalorder %v1943, 4
        %v1966 = vsel %vm1962, %v1946, %v1949
        %v1967 = vsel %vm1965, %v1955, 2102212464
        %v1968 = vsel %vm1964, %v1952, %v1967
        %v1969 = vsel %vm1963, %v1966, %v1968
        %v1970 = vsel %vm1962, %v1949, %v1952
        %v1971 = vsel %vm1965, %v1958, 920167782
        %v1972 = vsel %vm1964, %v1955, %v1971
        %v1973 = vsel %vm1963, %v1970, %v1972
        %v1974 = vsel %vm1962, %v1952, %v1955
        %v1975 = vsel %vm1965, %v1961, 1326507024
        %v1976 = vsel %vm1964, %v1958, %v1975
        %v1977 = vsel %vm1963, %v1974, %v1976
        %v1978 = vshll.u32 %v1938, 8
        %v1979 = vmul.u32.u64.compose %v1978, %v1977
        %v1980 = vextract.low.u32 %v1979
        %v1981 = vextract.high.u32 %v1979
        %v1982 = vmul.u32.u64.compose %v1978, %v1973
        %v1983 = vextract.low.u32 %v1982
        %v1984 = vextract.high.u32 %v1982
        %v1985 = vmul.u32 %v1978, %v1969
        %v1986 = vadd.s32 %v1981, %v1983
        %vm1987 = vc.u32 %v1981, %v1983
        %v1988 = vadd.s32 %v1984, 1
        %v1989 = vsel %vm1987, %v1988, %v1984
        %v1990 = vadd.s32 %v1985, %v1989
        %v1991 = vadd.s32 %v1990, 536870912
        %v1992 = vshrl.u32 %v1991, 30
        %v1993 = vshll.u32 %v1992, 30
        %v1994 = vsub.s32 %v1990, %v1993
        %vm1995 = vcmp.lt.s32.totalorder %v1994, 0
        %v1996 = vsub.s32 0, %v1994
        %v1997 = vsel %vm1995, %v1996, %v1994
        %v1998 = vclz %v1997
        %v1999 = vsub.s32 %v1998, 2
        %vm2000 = vcmp.gt.s32.totalorder 0, %v1999
        %v2001 = vsel %vm2000, 0, %v1999
        %v2002 = vsub.s32 32, %v2001
        %v2003 = vshll.u32 %v1994, %v2001
        %v2004 = vshrl.u32 %v1986, %v2002
        %v2005 = vor.u32 %v2003, %v2004
        %v2006 = vsub.s32 4294967266, %v2001
        %v2007 = vadd.s32 %v2006, 127
        %v2008 = vshll.u32 %v2007, 23
        %v2009 = vor.u32 4788187, %v2008
        %v2010 = vand.u32 2147483647, %v2009
        %v2012 = vcvt.s32.f32 %v2005
        %v2013 = vmul.f32 %v2012, %v2010
        %v2014 = vxor.u32 %v2013, 2147483648
        %v2015 = vsel %vm1932, %v2014, %v2013
        %v2016 = vsub.s32 4, %v1992
        %v2017 = vsel %vm1932, %v2016, %v1992
        %v2018 = vsel %vm1931, %v1249, %v2015
        %v2019 = vsel %vm1931, 0, %v2017
        %v2020 = vcosq.f32.pop %v2018
        %v2021 = vsinq.f32.pop %v2018
        %vm2022 = vweird.f32 %v1249
        %v2023 = vadd.s32 %v2019, 3
        %v2024 = vand.u32 %v2023, 3
        %vm2025 = vcmp.lt.s32.totalorder %v2024, 2
        %vm2026 = vcmp.eq.s32.totalorder %v2024, 0
        %v2027 = vxor.u32 %v2021, 2147483648
        %v2028 = vsel %vm2026, %v2020, %v2027
        %vm2029 = vcmp.eq.s32.totalorder %v2024, 2
        %v2030 = vxor.u32 %v2020, 2147483648
        %v2031 = vsel %vm2029, %v2030, %v2021
        %v2032 = vsel %vm2025, %v2028, %v2031
        %v2033 = vsel %vm2022, nan, %v2032
        %v2034 = vand.u32 2147483647, %v1255
        %vm2035 = vcmp.le.f32.partialorder %v2034, 0.7853982
        %vm2036 = vcmp.lt.s32.totalorder %v1255, 0
        %v2037 = vand.u32 %v1255, 2139095040
        %v2038 = vshrl.u32 %v2037, 23
        %v2039 = vsub.s32 %v2038, 127
        %v2040 = vand.u32 2147483647, %v1255
        %v2041 = vand.u32 %v2040, 8388607
        %v2042 = vor.u32 %v2041, 8388608
        %v2043 = vsub.s32 0, %v2042
        %v2044 = vadd.s32 %v2039, 1
        %vm2045 = vcmp.gt.s32.totalorder %v2044, 0
        %v2046 = vsel %vm2045, %v2044, 0
        %v2047 = vshrl.u32 %v2046, 5
        %v2048 = vand.u32 %v2046, 31
        %v2049 = vsub.s32 32, %v2048
        %v2050 = vshrl.u32 683565275, %v2049
        %v2051 = vshll.u32 683565275, %v2048
        %v2052 = vshrl.u32 2475754826, %v2049
        %v2053 = vor.u32 %v2051, %v2052
        %v2054 = vshll.u32 2475754826, %v2048
        %v2055 = vshrl.u32 2131351028, %v2049
        %v2056 = vor.u32 %v2054, %v2055
        %v2057 = vshll.u32 2131351028, %v2048
        %v2058 = vshrl.u32 2102212464, %v2049
        %v2059 = vor.u32 %v2057, %v2058
        %v2060 = vshll.u32 2102212464, %v2048
        %v2061 = vshrl.u32 920167782, %v2049
        %v2062 = vor.u32 %v2060, %v2061
        %v2063 = vshll.u32 920167782, %v2048
        %v2064 = vshrl.u32 1326507024, %v2049
        %v2065 = vor.u32 %v2063, %v2064
        %vm2066 = vcmp.lt.s32.totalorder %v2047, 1
        %vm2067 = vcmp.lt.s32.totalorder %v2047, 2
        %vm2068 = vcmp.lt.s32.totalorder %v2047, 3
        %vm2069 = vcmp.lt.s32.totalorder %v2047, 4
        %v2070 = vsel %vm2066, %v2050, %v2053
        %v2071 = vsel %vm2069, %v2059, 2102212464
        %v2072 = vsel %vm2068, %v2056, %v2071
        %v2073 = vsel %vm2067, %v2070, %v2072
        %v2074 = vsel %vm2066, %v2053, %v2056
        %v2075 = vsel %vm2069, %v2062, 920167782
        %v2076 = vsel %vm2068, %v2059, %v2075
        %v2077 = vsel %vm2067, %v2074, %v2076
        %v2078 = vsel %vm2066, %v2056, %v2059
        %v2079 = vsel %vm2069, %v2065, 1326507024
        %v2080 = vsel %vm2068, %v2062, %v2079
        %v2081 = vsel %vm2067, %v2078, %v2080
        %v2082 = vshll.u32 %v2042, 8
        %v2083 = vmul.u32.u64.compose %v2082, %v2081
        %v2084 = vextract.low.u32 %v2083
        %v2085 = vextract.high.u32 %v2083
        %v2086 = vmul.u32.u64.compose %v2082, %v2077
        %v2087 = vextract.low.u32 %v2086
        %v2088 = vextract.high.u32 %v2086
        %v2089 = vmul.u32 %v2082, %v2073
        %v2090 = vadd.s32 %v2085, %v2087
        %vm2091 = vc.u32 %v2085, %v2087
        %v2092 = vadd.s32 %v2088, 1
        %v2093 = vsel %vm2091, %v2092, %v2088
        %v2094 = vadd.s32 %v2089, %v2093
        %v2095 = vadd.s32 %v2094, 536870912
        %v2096 = vshrl.u32 %v2095, 30
        %v2097 = vshll.u32 %v2096, 30
        %v2098 = vsub.s32 %v2094, %v2097
        %vm2099 = vcmp.lt.s32.totalorder %v2098, 0
        %v2100 = vsub.s32 0, %v2098
        %v2101 = vsel %vm2099, %v2100, %v2098
        %v2102 = vclz %v2101
        %v2103 = vsub.s32 %v2102, 2
        %vm2104 = vcmp.gt.s32.totalorder 0, %v2103
        %v2105 = vsel %vm2104, 0, %v2103
        %v2106 = vsub.s32 32, %v2105
        %v2107 = vshll.u32 %v2098, %v2105
        %v2108 = vshrl.u32 %v2090, %v2106
        %v2109 = vor.u32 %v2107, %v2108
        %v2110 = vsub.s32 4294967266, %v2105
        %v2111 = vadd.s32 %v2110, 127
        %v2112 = vshll.u32 %v2111, 23
        %v2113 = vor.u32 4788187, %v2112
        %v2114 = vand.u32 2147483647, %v2113
        %v2116 = vcvt.s32.f32 %v2109
        %v2117 = vmul.f32 %v2116, %v2114
        %v2118 = vxor.u32 %v2117, 2147483648
        %v2119 = vsel %vm2036, %v2118, %v2117
        %v2120 = vsub.s32 4, %v2096
        %v2121 = vsel %vm2036, %v2120, %v2096
        %v2122 = vsel %vm2035, %v1255, %v2119
        %v2123 = vsel %vm2035, 0, %v2121
        %v2124 = vcosq.f32.pop %v2122
        %v2125 = vsinq.f32.pop %v2122
        %vm2126 = vweird.f32 %v1255
        %v2127 = vadd.s32 %v2123, 3
        %v2128 = vand.u32 %v2127, 3
        %vm2129 = vcmp.lt.s32.totalorder %v2128, 2
        %vm2130 = vcmp.eq.s32.totalorder %v2128, 0
        %v2131 = vxor.u32 %v2125, 2147483648
        %v2132 = vsel %vm2130, %v2124, %v2131
        %vm2133 = vcmp.eq.s32.totalorder %v2128, 2
        %v2134 = vxor.u32 %v2124, 2147483648
        %v2135 = vsel %vm2133, %v2134, %v2125
        %v2136 = vsel %vm2129, %v2132, %v2135
        %v2137 = vsel %vm2126, nan, %v2136
        %v2138 = vand.u32 2147483647, %v1261
        %vm2139 = vcmp.le.f32.partialorder %v2138, 0.7853982
        %vm2140 = vcmp.lt.s32.totalorder %v1261, 0
        %v2141 = vand.u32 %v1261, 2139095040
        %v2142 = vshrl.u32 %v2141, 23
        %v2143 = vsub.s32 %v2142, 127
        %v2144 = vand.u32 2147483647, %v1261
        %v2145 = vand.u32 %v2144, 8388607
        %v2146 = vor.u32 %v2145, 8388608
        %v2147 = vsub.s32 0, %v2146
        %v2148 = vadd.s32 %v2143, 1
        %vm2149 = vcmp.gt.s32.totalorder %v2148, 0
        %v2150 = vsel %vm2149, %v2148, 0
        %v2151 = vshrl.u32 %v2150, 5
        %v2152 = vand.u32 %v2150, 31
        %v2153 = vsub.s32 32, %v2152
        %v2154 = vshrl.u32 683565275, %v2153
        %v2155 = vshll.u32 683565275, %v2152
        %v2156 = vshrl.u32 2475754826, %v2153
        %v2157 = vor.u32 %v2155, %v2156
        %v2158 = vshll.u32 2475754826, %v2152
        %v2159 = vshrl.u32 2131351028, %v2153
        %v2160 = vor.u32 %v2158, %v2159
        %v2161 = vshll.u32 2131351028, %v2152
        %v2162 = vshrl.u32 2102212464, %v2153
        %v2163 = vor.u32 %v2161, %v2162
        %v2164 = vshll.u32 2102212464, %v2152
        %v2165 = vshrl.u32 920167782, %v2153
        %v2166 = vor.u32 %v2164, %v2165
        %v2167 = vshll.u32 920167782, %v2152
        %v2168 = vshrl.u32 1326507024, %v2153
        %v2169 = vor.u32 %v2167, %v2168
        %vm2170 = vcmp.lt.s32.totalorder %v2151, 1
        %vm2171 = vcmp.lt.s32.totalorder %v2151, 2
        %vm2172 = vcmp.lt.s32.totalorder %v2151, 3
        %vm2173 = vcmp.lt.s32.totalorder %v2151, 4
        %v2174 = vsel %vm2170, %v2154, %v2157
        %v2175 = vsel %vm2173, %v2163, 2102212464
        %v2176 = vsel %vm2172, %v2160, %v2175
        %v2177 = vsel %vm2171, %v2174, %v2176
        %v2178 = vsel %vm2170, %v2157, %v2160
        %v2179 = vsel %vm2173, %v2166, 920167782
        %v2180 = vsel %vm2172, %v2163, %v2179
        %v2181 = vsel %vm2171, %v2178, %v2180
        %v2182 = vsel %vm2170, %v2160, %v2163
        %v2183 = vsel %vm2173, %v2169, 1326507024
        %v2184 = vsel %vm2172, %v2166, %v2183
        %v2185 = vsel %vm2171, %v2182, %v2184
        %v2186 = vshll.u32 %v2146, 8
        %v2187 = vmul.u32.u64.compose %v2186, %v2185
        %v2188 = vextract.low.u32 %v2187
        %v2189 = vextract.high.u32 %v2187
        %v2190 = vmul.u32.u64.compose %v2186, %v2181
        %v2191 = vextract.low.u32 %v2190
        %v2192 = vextract.high.u32 %v2190
        %v2193 = vmul.u32 %v2186, %v2177
        %v2194 = vadd.s32 %v2189, %v2191
        %vm2195 = vc.u32 %v2189, %v2191
        %v2196 = vadd.s32 %v2192, 1
        %v2197 = vsel %vm2195, %v2196, %v2192
        %v2198 = vadd.s32 %v2193, %v2197
        %v2199 = vadd.s32 %v2198, 536870912
        %v2200 = vshrl.u32 %v2199, 30
        %v2201 = vshll.u32 %v2200, 30
        %v2202 = vsub.s32 %v2198, %v2201
        %vm2203 = vcmp.lt.s32.totalorder %v2202, 0
        %v2204 = vsub.s32 0, %v2202
        %v2205 = vsel %vm2203, %v2204, %v2202
        %v2206 = vclz %v2205
        %v2207 = vsub.s32 %v2206, 2
        %vm2208 = vcmp.gt.s32.totalorder 0, %v2207
        %v2209 = vsel %vm2208, 0, %v2207
        %v2210 = vsub.s32 32, %v2209
        %v2211 = vshll.u32 %v2202, %v2209
        %v2212 = vshrl.u32 %v2194, %v2210
        %v2213 = vor.u32 %v2211, %v2212
        %v2214 = vsub.s32 4294967266, %v2209
        %v2215 = vadd.s32 %v2214, 127
        %v2216 = vshll.u32 %v2215, 23
        %v2217 = vor.u32 4788187, %v2216
        %v2218 = vand.u32 2147483647, %v2217
        %v2220 = vcvt.s32.f32 %v2213
        %v2221 = vmul.f32 %v2220, %v2218
        %v2222 = vxor.u32 %v2221, 2147483648
        %v2223 = vsel %vm2140, %v2222, %v2221
        %v2224 = vsub.s32 4, %v2200
        %v2225 = vsel %vm2140, %v2224, %v2200
        %v2226 = vsel %vm2139, %v1261, %v2223
        %v2227 = vsel %vm2139, 0, %v2225
        %v2228 = vcosq.f32.pop %v2226
        %v2229 = vsinq.f32.pop %v2226
        %vm2230 = vweird.f32 %v1261
        %v2231 = vadd.s32 %v2227, 3
        %v2232 = vand.u32 %v2231, 3
        %vm2233 = vcmp.lt.s32.totalorder %v2232, 2
        %vm2234 = vcmp.eq.s32.totalorder %v2232, 0
        %v2235 = vxor.u32 %v2229, 2147483648
        %v2236 = vsel %vm2234, %v2228, %v2235
        %vm2237 = vcmp.eq.s32.totalorder %v2232, 2
        %v2238 = vxor.u32 %v2228, 2147483648
        %v2239 = vsel %vm2237, %v2238, %v2229
        %v2240 = vsel %vm2233, %v2236, %v2239
        %v2241 = vsel %vm2230, nan, %v2240
        %v2242 = vand.u32 2147483647, %v1267
        %vm2243 = vcmp.le.f32.partialorder %v2242, 0.7853982
        %vm2244 = vcmp.lt.s32.totalorder %v1267, 0
        %v2245 = vand.u32 %v1267, 2139095040
        %v2246 = vshrl.u32 %v2245, 23
        %v2247 = vsub.s32 %v2246, 127
        %v2248 = vand.u32 2147483647, %v1267
        %v2249 = vand.u32 %v2248, 8388607
        %v2250 = vor.u32 %v2249, 8388608
        %v2251 = vsub.s32 0, %v2250
        %v2252 = vadd.s32 %v2247, 1
        %vm2253 = vcmp.gt.s32.totalorder %v2252, 0
        %v2254 = vsel %vm2253, %v2252, 0
        %v2255 = vshrl.u32 %v2254, 5
        %v2256 = vand.u32 %v2254, 31
        %v2257 = vsub.s32 32, %v2256
        %v2258 = vshrl.u32 683565275, %v2257
        %v2259 = vshll.u32 683565275, %v2256
        %v2260 = vshrl.u32 2475754826, %v2257
        %v2261 = vor.u32 %v2259, %v2260
        %v2262 = vshll.u32 2475754826, %v2256
        %v2263 = vshrl.u32 2131351028, %v2257
        %v2264 = vor.u32 %v2262, %v2263
        %v2265 = vshll.u32 2131351028, %v2256
        %v2266 = vshrl.u32 2102212464, %v2257
        %v2267 = vor.u32 %v2265, %v2266
        %v2268 = vshll.u32 2102212464, %v2256
        %v2269 = vshrl.u32 920167782, %v2257
        %v2270 = vor.u32 %v2268, %v2269
        %v2271 = vshll.u32 920167782, %v2256
        %v2272 = vshrl.u32 1326507024, %v2257
        %v2273 = vor.u32 %v2271, %v2272
        %vm2274 = vcmp.lt.s32.totalorder %v2255, 1
        %vm2275 = vcmp.lt.s32.totalorder %v2255, 2
        %vm2276 = vcmp.lt.s32.totalorder %v2255, 3
        %vm2277 = vcmp.lt.s32.totalorder %v2255, 4
        %v2278 = vsel %vm2274, %v2258, %v2261
        %v2279 = vsel %vm2277, %v2267, 2102212464
        %v2280 = vsel %vm2276, %v2264, %v2279
        %v2281 = vsel %vm2275, %v2278, %v2280
        %v2282 = vsel %vm2274, %v2261, %v2264
        %v2283 = vsel %vm2277, %v2270, 920167782
        %v2284 = vsel %vm2276, %v2267, %v2283
        %v2285 = vsel %vm2275, %v2282, %v2284
        %v2286 = vsel %vm2274, %v2264, %v2267
        %v2287 = vsel %vm2277, %v2273, 1326507024
        %v2288 = vsel %vm2276, %v2270, %v2287
        %v2289 = vsel %vm2275, %v2286, %v2288
        %v2290 = vshll.u32 %v2250, 8
        %v2291 = vmul.u32.u64.compose %v2290, %v2289
        %v2292 = vextract.low.u32 %v2291
        %v2293 = vextract.high.u32 %v2291
        %v2294 = vmul.u32.u64.compose %v2290, %v2285
        %v2295 = vextract.low.u32 %v2294
        %v2296 = vextract.high.u32 %v2294
        %v2297 = vmul.u32 %v2290, %v2281
        %v2298 = vadd.s32 %v2293, %v2295
        %vm2299 = vc.u32 %v2293, %v2295
        %v2300 = vadd.s32 %v2296, 1
        %v2301 = vsel %vm2299, %v2300, %v2296
        %v2302 = vadd.s32 %v2297, %v2301
        %v2303 = vadd.s32 %v2302, 536870912
        %v2304 = vshrl.u32 %v2303, 30
        %v2305 = vshll.u32 %v2304, 30
        %v2306 = vsub.s32 %v2302, %v2305
        %vm2307 = vcmp.lt.s32.totalorder %v2306, 0
        %v2308 = vsub.s32 0, %v2306
        %v2309 = vsel %vm2307, %v2308, %v2306
        %v2310 = vclz %v2309
        %v2311 = vsub.s32 %v2310, 2
        %vm2312 = vcmp.gt.s32.totalorder 0, %v2311
        %v2313 = vsel %vm2312, 0, %v2311
        %v2314 = vsub.s32 32, %v2313
        %v2315 = vshll.u32 %v2306, %v2313
        %v2316 = vshrl.u32 %v2298, %v2314
        %v2317 = vor.u32 %v2315, %v2316
        %v2318 = vsub.s32 4294967266, %v2313
        %v2319 = vadd.s32 %v2318, 127
        %v2320 = vshll.u32 %v2319, 23
        %v2321 = vor.u32 4788187, %v2320
        %v2322 = vand.u32 2147483647, %v2321
        %v2324 = vcvt.s32.f32 %v2317
        %v2325 = vmul.f32 %v2324, %v2322
        %v2326 = vxor.u32 %v2325, 2147483648
        %v2327 = vsel %vm2244, %v2326, %v2325
        %v2328 = vsub.s32 4, %v2304
        %v2329 = vsel %vm2244, %v2328, %v2304
        %v2330 = vsel %vm2243, %v1267, %v2327
        %v2331 = vsel %vm2243, 0, %v2329
        %v2332 = vcosq.f32.pop %v2330
        %v2333 = vsinq.f32.pop %v2330
        %vm2334 = vweird.f32 %v1267
        %v2335 = vadd.s32 %v2331, 3
        %v2336 = vand.u32 %v2335, 3
        %vm2337 = vcmp.lt.s32.totalorder %v2336, 2
        %vm2338 = vcmp.eq.s32.totalorder %v2336, 0
        %v2339 = vxor.u32 %v2333, 2147483648
        %v2340 = vsel %vm2338, %v2332, %v2339
        %vm2341 = vcmp.eq.s32.totalorder %v2336, 2
        %v2342 = vxor.u32 %v2332, 2147483648
        %v2343 = vsel %vm2341, %v2342, %v2333
        %v2344 = vsel %vm2337, %v2340, %v2343
        %v2345 = vsel %vm2334, nan, %v2344
        %v2346 = vand.u32 2147483647, %v1273
        %vm2347 = vcmp.le.f32.partialorder %v2346, 0.7853982
        %vm2348 = vcmp.lt.s32.totalorder %v1273, 0
        %v2349 = vand.u32 %v1273, 2139095040
        %v2350 = vshrl.u32 %v2349, 23
        %v2351 = vsub.s32 %v2350, 127
        %v2352 = vand.u32 2147483647, %v1273
        %v2353 = vand.u32 %v2352, 8388607
        %v2354 = vor.u32 %v2353, 8388608
        %v2355 = vsub.s32 0, %v2354
        %v2356 = vadd.s32 %v2351, 1
        %vm2357 = vcmp.gt.s32.totalorder %v2356, 0
        %v2358 = vsel %vm2357, %v2356, 0
        %v2359 = vshrl.u32 %v2358, 5
        %v2360 = vand.u32 %v2358, 31
        %v2361 = vsub.s32 32, %v2360
        %v2362 = vshrl.u32 683565275, %v2361
        %v2363 = vshll.u32 683565275, %v2360
        %v2364 = vshrl.u32 2475754826, %v2361
        %v2365 = vor.u32 %v2363, %v2364
        %v2366 = vshll.u32 2475754826, %v2360
        %v2367 = vshrl.u32 2131351028, %v2361
        %v2368 = vor.u32 %v2366, %v2367
        %v2369 = vshll.u32 2131351028, %v2360
        %v2370 = vshrl.u32 2102212464, %v2361
        %v2371 = vor.u32 %v2369, %v2370
        %v2372 = vshll.u32 2102212464, %v2360
        %v2373 = vshrl.u32 920167782, %v2361
        %v2374 = vor.u32 %v2372, %v2373
        %v2375 = vshll.u32 920167782, %v2360
        %v2376 = vshrl.u32 1326507024, %v2361
        %v2377 = vor.u32 %v2375, %v2376
        %vm2378 = vcmp.lt.s32.totalorder %v2359, 1
        %vm2379 = vcmp.lt.s32.totalorder %v2359, 2
        %vm2380 = vcmp.lt.s32.totalorder %v2359, 3
        %vm2381 = vcmp.lt.s32.totalorder %v2359, 4
        %v2382 = vsel %vm2378, %v2362, %v2365
        %v2383 = vsel %vm2381, %v2371, 2102212464
        %v2384 = vsel %vm2380, %v2368, %v2383
        %v2385 = vsel %vm2379, %v2382, %v2384
        %v2386 = vsel %vm2378, %v2365, %v2368
        %v2387 = vsel %vm2381, %v2374, 920167782
        %v2388 = vsel %vm2380, %v2371, %v2387
        %v2389 = vsel %vm2379, %v2386, %v2388
        %v2390 = vsel %vm2378, %v2368, %v2371
        %v2391 = vsel %vm2381, %v2377, 1326507024
        %v2392 = vsel %vm2380, %v2374, %v2391
        %v2393 = vsel %vm2379, %v2390, %v2392
        %v2394 = vshll.u32 %v2354, 8
        %v2395 = vmul.u32.u64.compose %v2394, %v2393
        %v2396 = vextract.low.u32 %v2395
        %v2397 = vextract.high.u32 %v2395
        %v2398 = vmul.u32.u64.compose %v2394, %v2389
        %v2399 = vextract.low.u32 %v2398
        %v2400 = vextract.high.u32 %v2398
        %v2401 = vmul.u32 %v2394, %v2385
        %v2402 = vadd.s32 %v2397, %v2399
        %vm2403 = vc.u32 %v2397, %v2399
        %v2404 = vadd.s32 %v2400, 1
        %v2405 = vsel %vm2403, %v2404, %v2400
        %v2406 = vadd.s32 %v2401, %v2405
        %v2407 = vadd.s32 %v2406, 536870912
        %v2408 = vshrl.u32 %v2407, 30
        %v2409 = vshll.u32 %v2408, 30
        %v2410 = vsub.s32 %v2406, %v2409
        %vm2411 = vcmp.lt.s32.totalorder %v2410, 0
        %v2412 = vsub.s32 0, %v2410
        %v2413 = vsel %vm2411, %v2412, %v2410
        %v2414 = vclz %v2413
        %v2415 = vsub.s32 %v2414, 2
        %vm2416 = vcmp.gt.s32.totalorder 0, %v2415
        %v2417 = vsel %vm2416, 0, %v2415
        %v2418 = vsub.s32 32, %v2417
        %v2419 = vshll.u32 %v2410, %v2417
        %v2420 = vshrl.u32 %v2402, %v2418
        %v2421 = vor.u32 %v2419, %v2420
        %v2422 = vsub.s32 4294967266, %v2417
        %v2423 = vadd.s32 %v2422, 127
        %v2424 = vshll.u32 %v2423, 23
        %v2425 = vor.u32 4788187, %v2424
        %v2426 = vand.u32 2147483647, %v2425
        %v2428 = vcvt.s32.f32 %v2421
        %v2429 = vmul.f32 %v2428, %v2426
        %v2430 = vxor.u32 %v2429, 2147483648
        %v2431 = vsel %vm2348, %v2430, %v2429
        %v2432 = vsub.s32 4, %v2408
        %v2433 = vsel %vm2348, %v2432, %v2408
        %v2434 = vsel %vm2347, %v1273, %v2431
        %v2435 = vsel %vm2347, 0, %v2433
        %v2436 = vcosq.f32.pop %v2434
        %v2437 = vsinq.f32.pop %v2434
        %vm2438 = vweird.f32 %v1273
        %v2439 = vadd.s32 %v2435, 3
        %v2440 = vand.u32 %v2439, 3
        %vm2441 = vcmp.lt.s32.totalorder %v2440, 2
        %vm2442 = vcmp.eq.s32.totalorder %v2440, 0
        %v2443 = vxor.u32 %v2437, 2147483648
        %v2444 = vsel %vm2442, %v2436, %v2443
        %vm2445 = vcmp.eq.s32.totalorder %v2440, 2
        %v2446 = vxor.u32 %v2436, 2147483648
        %v2447 = vsel %vm2445, %v2446, %v2437
        %v2448 = vsel %vm2441, %v2444, %v2447
        %v2449 = vsel %vm2438, nan, %v2448
        %v2450 = vand.u32 2147483647, %v1279
        %vm2451 = vcmp.le.f32.partialorder %v2450, 0.7853982
        %vm2452 = vcmp.lt.s32.totalorder %v1279, 0
        %v2453 = vand.u32 %v1279, 2139095040
        %v2454 = vshrl.u32 %v2453, 23
        %v2455 = vsub.s32 %v2454, 127
        %v2456 = vand.u32 2147483647, %v1279
        %v2457 = vand.u32 %v2456, 8388607
        %v2458 = vor.u32 %v2457, 8388608
        %v2459 = vsub.s32 0, %v2458
        %v2460 = vadd.s32 %v2455, 1
        %vm2461 = vcmp.gt.s32.totalorder %v2460, 0
        %v2462 = vsel %vm2461, %v2460, 0
        %v2463 = vshrl.u32 %v2462, 5
        %v2464 = vand.u32 %v2462, 31
        %v2465 = vsub.s32 32, %v2464
        %v2466 = vshrl.u32 683565275, %v2465
        %v2467 = vshll.u32 683565275, %v2464
        %v2468 = vshrl.u32 2475754826, %v2465
        %v2469 = vor.u32 %v2467, %v2468
        %v2470 = vshll.u32 2475754826, %v2464
        %v2471 = vshrl.u32 2131351028, %v2465
        %v2472 = vor.u32 %v2470, %v2471
        %v2473 = vshll.u32 2131351028, %v2464
        %v2474 = vshrl.u32 2102212464, %v2465
        %v2475 = vor.u32 %v2473, %v2474
        %v2476 = vshll.u32 2102212464, %v2464
        %v2477 = vshrl.u32 920167782, %v2465
        %v2478 = vor.u32 %v2476, %v2477
        %v2479 = vshll.u32 920167782, %v2464
        %v2480 = vshrl.u32 1326507024, %v2465
        %v2481 = vor.u32 %v2479, %v2480
        %vm2482 = vcmp.lt.s32.totalorder %v2463, 1
        %vm2483 = vcmp.lt.s32.totalorder %v2463, 2
        %vm2484 = vcmp.lt.s32.totalorder %v2463, 3
        %vm2485 = vcmp.lt.s32.totalorder %v2463, 4
        %v2486 = vsel %vm2482, %v2466, %v2469
        %v2487 = vsel %vm2485, %v2475, 2102212464
        %v2488 = vsel %vm2484, %v2472, %v2487
        %v2489 = vsel %vm2483, %v2486, %v2488
        %v2490 = vsel %vm2482, %v2469, %v2472
        %v2491 = vsel %vm2485, %v2478, 920167782
        %v2492 = vsel %vm2484, %v2475, %v2491
        %v2493 = vsel %vm2483, %v2490, %v2492
        %v2494 = vsel %vm2482, %v2472, %v2475
        %v2495 = vsel %vm2485, %v2481, 1326507024
        %v2496 = vsel %vm2484, %v2478, %v2495
        %v2497 = vsel %vm2483, %v2494, %v2496
        %v2498 = vshll.u32 %v2458, 8
        %v2499 = vmul.u32.u64.compose %v2498, %v2497
        %v2500 = vextract.low.u32 %v2499
        %v2501 = vextract.high.u32 %v2499
        %v2502 = vmul.u32.u64.compose %v2498, %v2493
        %v2503 = vextract.low.u32 %v2502
        %v2504 = vextract.high.u32 %v2502
        %v2505 = vmul.u32 %v2498, %v2489
        %v2506 = vadd.s32 %v2501, %v2503
        %vm2507 = vc.u32 %v2501, %v2503
        %v2508 = vadd.s32 %v2504, 1
        %v2509 = vsel %vm2507, %v2508, %v2504
        %v2510 = vadd.s32 %v2505, %v2509
        %v2511 = vadd.s32 %v2510, 536870912
        %v2512 = vshrl.u32 %v2511, 30
        %v2513 = vshll.u32 %v2512, 30
        %v2514 = vsub.s32 %v2510, %v2513
        %vm2515 = vcmp.lt.s32.totalorder %v2514, 0
        %v2516 = vsub.s32 0, %v2514
        %v2517 = vsel %vm2515, %v2516, %v2514
        %v2518 = vclz %v2517
        %v2519 = vsub.s32 %v2518, 2
        %vm2520 = vcmp.gt.s32.totalorder 0, %v2519
        %v2521 = vsel %vm2520, 0, %v2519
        %v2522 = vsub.s32 32, %v2521
        %v2523 = vshll.u32 %v2514, %v2521
        %v2524 = vshrl.u32 %v2506, %v2522
        %v2525 = vor.u32 %v2523, %v2524
        %v2526 = vsub.s32 4294967266, %v2521
        %v2527 = vadd.s32 %v2526, 127
        %v2528 = vshll.u32 %v2527, 23
        %v2529 = vor.u32 4788187, %v2528
        %v2530 = vand.u32 2147483647, %v2529
        %v2532 = vcvt.s32.f32 %v2525
        %v2533 = vmul.f32 %v2532, %v2530
        %v2534 = vxor.u32 %v2533, 2147483648
        %v2535 = vsel %vm2452, %v2534, %v2533
        %v2536 = vsub.s32 4, %v2512
        %v2537 = vsel %vm2452, %v2536, %v2512
        %v2538 = vsel %vm2451, %v1279, %v2535
        %v2539 = vsel %vm2451, 0, %v2537
        %v2540 = vcosq.f32.pop %v2538
        %v2541 = vsinq.f32.pop %v2538
        %vm2542 = vweird.f32 %v1279
        %v2543 = vadd.s32 %v2539, 3
        %v2544 = vand.u32 %v2543, 3
        %vm2545 = vcmp.lt.s32.totalorder %v2544, 2
        %vm2546 = vcmp.eq.s32.totalorder %v2544, 0
        %v2547 = vxor.u32 %v2541, 2147483648
        %v2548 = vsel %vm2546, %v2540, %v2547
        %vm2549 = vcmp.eq.s32.totalorder %v2544, 2
        %v2550 = vxor.u32 %v2540, 2147483648
        %v2551 = vsel %vm2549, %v2550, %v2541
        %v2552 = vsel %vm2545, %v2548, %v2551
        %v2553 = vsel %vm2542, nan, %v2552
        %v2554 = vand.u32 2147483647, %v1285
        %vm2555 = vcmp.le.f32.partialorder %v2554, 0.7853982
        %vm2556 = vcmp.lt.s32.totalorder %v1285, 0
        %v2557 = vand.u32 %v1285, 2139095040
        %v2558 = vshrl.u32 %v2557, 23
        %v2559 = vsub.s32 %v2558, 127
        %v2560 = vand.u32 2147483647, %v1285
        %v2561 = vand.u32 %v2560, 8388607
        %v2562 = vor.u32 %v2561, 8388608
        %v2563 = vsub.s32 0, %v2562
        %v2564 = vadd.s32 %v2559, 1
        %vm2565 = vcmp.gt.s32.totalorder %v2564, 0
        %v2566 = vsel %vm2565, %v2564, 0
        %v2567 = vshrl.u32 %v2566, 5
        %v2568 = vand.u32 %v2566, 31
        %v2569 = vsub.s32 32, %v2568
        %v2570 = vshrl.u32 683565275, %v2569
        %v2571 = vshll.u32 683565275, %v2568
        %v2572 = vshrl.u32 2475754826, %v2569
        %v2573 = vor.u32 %v2571, %v2572
        %v2574 = vshll.u32 2475754826, %v2568
        %v2575 = vshrl.u32 2131351028, %v2569
        %v2576 = vor.u32 %v2574, %v2575
        %v2577 = vshll.u32 2131351028, %v2568
        %v2578 = vshrl.u32 2102212464, %v2569
        %v2579 = vor.u32 %v2577, %v2578
        %v2580 = vshll.u32 2102212464, %v2568
        %v2581 = vshrl.u32 920167782, %v2569
        %v2582 = vor.u32 %v2580, %v2581
        %v2583 = vshll.u32 920167782, %v2568
        %v2584 = vshrl.u32 1326507024, %v2569
        %v2585 = vor.u32 %v2583, %v2584
        %vm2586 = vcmp.lt.s32.totalorder %v2567, 1
        %vm2587 = vcmp.lt.s32.totalorder %v2567, 2
        %vm2588 = vcmp.lt.s32.totalorder %v2567, 3
        %vm2589 = vcmp.lt.s32.totalorder %v2567, 4
        %v2590 = vsel %vm2586, %v2570, %v2573
        %v2591 = vsel %vm2589, %v2579, 2102212464
        %v2592 = vsel %vm2588, %v2576, %v2591
        %v2593 = vsel %vm2587, %v2590, %v2592
        %v2594 = vsel %vm2586, %v2573, %v2576
        %v2595 = vsel %vm2589, %v2582, 920167782
        %v2596 = vsel %vm2588, %v2579, %v2595
        %v2597 = vsel %vm2587, %v2594, %v2596
        %v2598 = vsel %vm2586, %v2576, %v2579
        %v2599 = vsel %vm2589, %v2585, 1326507024
        %v2600 = vsel %vm2588, %v2582, %v2599
        %v2601 = vsel %vm2587, %v2598, %v2600
        %v2602 = vshll.u32 %v2562, 8
        %v2603 = vmul.u32.u64.compose %v2602, %v2601
        %v2604 = vextract.low.u32 %v2603
        %v2605 = vextract.high.u32 %v2603
        %v2606 = vmul.u32.u64.compose %v2602, %v2597
        %v2607 = vextract.low.u32 %v2606
        %v2608 = vextract.high.u32 %v2606
        %v2609 = vmul.u32 %v2602, %v2593
        %v2610 = vadd.s32 %v2605, %v2607
        %vm2611 = vc.u32 %v2605, %v2607
        %v2612 = vadd.s32 %v2608, 1
        %v2613 = vsel %vm2611, %v2612, %v2608
        %v2614 = vadd.s32 %v2609, %v2613
        %v2615 = vadd.s32 %v2614, 536870912
        %v2616 = vshrl.u32 %v2615, 30
        %v2617 = vshll.u32 %v2616, 30
        %v2618 = vsub.s32 %v2614, %v2617
        %vm2619 = vcmp.lt.s32.totalorder %v2618, 0
        %v2620 = vsub.s32 0, %v2618
        %v2621 = vsel %vm2619, %v2620, %v2618
        %v2622 = vclz %v2621
        %v2623 = vsub.s32 %v2622, 2
        %vm2624 = vcmp.gt.s32.totalorder 0, %v2623
        %v2625 = vsel %vm2624, 0, %v2623
        %v2626 = vsub.s32 32, %v2625
        %v2627 = vshll.u32 %v2618, %v2625
        %v2628 = vshrl.u32 %v2610, %v2626
        %v2629 = vor.u32 %v2627, %v2628
        %v2630 = vsub.s32 4294967266, %v2625
        %v2631 = vadd.s32 %v2630, 127
        %v2632 = vshll.u32 %v2631, 23
        %v2633 = vor.u32 4788187, %v2632
        %v2634 = vand.u32 2147483647, %v2633
        %v2636 = vcvt.s32.f32 %v2629
        %v2637 = vmul.f32 %v2636, %v2634
        %v2638 = vxor.u32 %v2637, 2147483648
        %v2639 = vsel %vm2556, %v2638, %v2637
        %v2640 = vsub.s32 4, %v2616
        %v2641 = vsel %vm2556, %v2640, %v2616
        %v2642 = vsel %vm2555, %v1285, %v2639
        %v2643 = vsel %vm2555, 0, %v2641
        %v2644 = vcosq.f32.pop %v2642
        %v2645 = vsinq.f32.pop %v2642
        %vm2646 = vweird.f32 %v1285
        %v2647 = vadd.s32 %v2643, 3
        %v2648 = vand.u32 %v2647, 3
        %vm2649 = vcmp.lt.s32.totalorder %v2648, 2
        %vm2650 = vcmp.eq.s32.totalorder %v2648, 0
        %v2651 = vxor.u32 %v2645, 2147483648
        %v2652 = vsel %vm2650, %v2644, %v2651
        %vm2653 = vcmp.eq.s32.totalorder %v2648, 2
        %v2654 = vxor.u32 %v2644, 2147483648
        %v2655 = vsel %vm2653, %v2654, %v2645
        %v2656 = vsel %vm2649, %v2652, %v2655
        %v2657 = vsel %vm2646, nan, %v2656
        %v2658 = vand.u32 2147483647, %v1291
        %vm2659 = vcmp.le.f32.partialorder %v2658, 0.7853982
        %vm2660 = vcmp.lt.s32.totalorder %v1291, 0
        %v2661 = vand.u32 %v1291, 2139095040
        %v2662 = vshrl.u32 %v2661, 23
        %v2663 = vsub.s32 %v2662, 127
        %v2664 = vand.u32 2147483647, %v1291
        %v2665 = vand.u32 %v2664, 8388607
        %v2666 = vor.u32 %v2665, 8388608
        %v2667 = vsub.s32 0, %v2666
        %v2668 = vadd.s32 %v2663, 1
        %vm2669 = vcmp.gt.s32.totalorder %v2668, 0
        %v2670 = vsel %vm2669, %v2668, 0
        %v2671 = vshrl.u32 %v2670, 5
        %v2672 = vand.u32 %v2670, 31
        %v2673 = vsub.s32 32, %v2672
        %v2674 = vshrl.u32 683565275, %v2673
        %v2675 = vshll.u32 683565275, %v2672
        %v2676 = vshrl.u32 2475754826, %v2673
        %v2677 = vor.u32 %v2675, %v2676
        %v2678 = vshll.u32 2475754826, %v2672
        %v2679 = vshrl.u32 2131351028, %v2673
        %v2680 = vor.u32 %v2678, %v2679
        %v2681 = vshll.u32 2131351028, %v2672
        %v2682 = vshrl.u32 2102212464, %v2673
        %v2683 = vor.u32 %v2681, %v2682
        %v2684 = vshll.u32 2102212464, %v2672
        %v2685 = vshrl.u32 920167782, %v2673
        %v2686 = vor.u32 %v2684, %v2685
        %v2687 = vshll.u32 920167782, %v2672
        %v2688 = vshrl.u32 1326507024, %v2673
        %v2689 = vor.u32 %v2687, %v2688
        %vm2690 = vcmp.lt.s32.totalorder %v2671, 1
        %vm2691 = vcmp.lt.s32.totalorder %v2671, 2
        %vm2692 = vcmp.lt.s32.totalorder %v2671, 3
        %vm2693 = vcmp.lt.s32.totalorder %v2671, 4
        %v2694 = vsel %vm2690, %v2674, %v2677
        %v2695 = vsel %vm2693, %v2683, 2102212464
        %v2696 = vsel %vm2692, %v2680, %v2695
        %v2697 = vsel %vm2691, %v2694, %v2696
        %v2698 = vsel %vm2690, %v2677, %v2680
        %v2699 = vsel %vm2693, %v2686, 920167782
        %v2700 = vsel %vm2692, %v2683, %v2699
        %v2701 = vsel %vm2691, %v2698, %v2700
        %v2702 = vsel %vm2690, %v2680, %v2683
        %v2703 = vsel %vm2693, %v2689, 1326507024
        %v2704 = vsel %vm2692, %v2686, %v2703
        %v2705 = vsel %vm2691, %v2702, %v2704
        %v2706 = vshll.u32 %v2666, 8
        %v2707 = vmul.u32.u64.compose %v2706, %v2705
        %v2708 = vextract.low.u32 %v2707
        %v2709 = vextract.high.u32 %v2707
        %v2710 = vmul.u32.u64.compose %v2706, %v2701
        %v2711 = vextract.low.u32 %v2710
        %v2712 = vextract.high.u32 %v2710
        %v2713 = vmul.u32 %v2706, %v2697
        %v2714 = vadd.s32 %v2709, %v2711
        %vm2715 = vc.u32 %v2709, %v2711
        %v2716 = vadd.s32 %v2712, 1
        %v2717 = vsel %vm2715, %v2716, %v2712
        %v2718 = vadd.s32 %v2713, %v2717
        %v2719 = vadd.s32 %v2718, 536870912
        %v2720 = vshrl.u32 %v2719, 30
        %v2721 = vshll.u32 %v2720, 30
        %v2722 = vsub.s32 %v2718, %v2721
        %vm2723 = vcmp.lt.s32.totalorder %v2722, 0
        %v2724 = vsub.s32 0, %v2722
        %v2725 = vsel %vm2723, %v2724, %v2722
        %v2726 = vclz %v2725
        %v2727 = vsub.s32 %v2726, 2
        %vm2728 = vcmp.gt.s32.totalorder 0, %v2727
        %v2729 = vsel %vm2728, 0, %v2727
        %v2730 = vsub.s32 32, %v2729
        %v2731 = vshll.u32 %v2722, %v2729
        %v2732 = vshrl.u32 %v2714, %v2730
        %v2733 = vor.u32 %v2731, %v2732
        %v2734 = vsub.s32 4294967266, %v2729
        %v2735 = vadd.s32 %v2734, 127
        %v2736 = vshll.u32 %v2735, 23
        %v2737 = vor.u32 4788187, %v2736
        %v2738 = vand.u32 2147483647, %v2737
        %v2740 = vcvt.s32.f32 %v2733
        %v2741 = vmul.f32 %v2740, %v2738
        %v2742 = vxor.u32 %v2741, 2147483648
        %v2743 = vsel %vm2660, %v2742, %v2741
        %v2744 = vsub.s32 4, %v2720
        %v2745 = vsel %vm2660, %v2744, %v2720
        %v2746 = vsel %vm2659, %v1291, %v2743
        %v2747 = vsel %vm2659, 0, %v2745
        %v2748 = vcosq.f32.pop %v2746
        %v2749 = vsinq.f32.pop %v2746
        %vm2750 = vweird.f32 %v1291
        %v2751 = vadd.s32 %v2747, 3
        %v2752 = vand.u32 %v2751, 3
        %vm2753 = vcmp.lt.s32.totalorder %v2752, 2
        %vm2754 = vcmp.eq.s32.totalorder %v2752, 0
        %v2755 = vxor.u32 %v2749, 2147483648
        %v2756 = vsel %vm2754, %v2748, %v2755
        %vm2757 = vcmp.eq.s32.totalorder %v2752, 2
        %v2758 = vxor.u32 %v2748, 2147483648
        %v2759 = vsel %vm2757, %v2758, %v2749
        %v2760 = vsel %vm2753, %v2756, %v2759
        %v2761 = vsel %vm2750, nan, %v2760
        %v2762 = vand.u32 2147483647, %v1297
        %vm2763 = vcmp.le.f32.partialorder %v2762, 0.7853982
        %vm2764 = vcmp.lt.s32.totalorder %v1297, 0
        %v2765 = vand.u32 %v1297, 2139095040
        %v2766 = vshrl.u32 %v2765, 23
        %v2767 = vsub.s32 %v2766, 127
        %v2768 = vand.u32 2147483647, %v1297
        %v2769 = vand.u32 %v2768, 8388607
        %v2770 = vor.u32 %v2769, 8388608
        %v2771 = vsub.s32 0, %v2770
        %v2772 = vadd.s32 %v2767, 1
        %vm2773 = vcmp.gt.s32.totalorder %v2772, 0
        %v2774 = vsel %vm2773, %v2772, 0
        %v2775 = vshrl.u32 %v2774, 5
        %v2776 = vand.u32 %v2774, 31
        %v2777 = vsub.s32 32, %v2776
        %v2778 = vshrl.u32 683565275, %v2777
        %v2779 = vshll.u32 683565275, %v2776
        %v2780 = vshrl.u32 2475754826, %v2777
        %v2781 = vor.u32 %v2779, %v2780
        %v2782 = vshll.u32 2475754826, %v2776
        %v2783 = vshrl.u32 2131351028, %v2777
        %v2784 = vor.u32 %v2782, %v2783
        %v2785 = vshll.u32 2131351028, %v2776
        %v2786 = vshrl.u32 2102212464, %v2777
        %v2787 = vor.u32 %v2785, %v2786
        %v2788 = vshll.u32 2102212464, %v2776
        %v2789 = vshrl.u32 920167782, %v2777
        %v2790 = vor.u32 %v2788, %v2789
        %v2791 = vshll.u32 920167782, %v2776
        %v2792 = vshrl.u32 1326507024, %v2777
        %v2793 = vor.u32 %v2791, %v2792
        %vm2794 = vcmp.lt.s32.totalorder %v2775, 1
        %vm2795 = vcmp.lt.s32.totalorder %v2775, 2
        %vm2796 = vcmp.lt.s32.totalorder %v2775, 3
        %vm2797 = vcmp.lt.s32.totalorder %v2775, 4
        %v2798 = vsel %vm2794, %v2778, %v2781
        %v2799 = vsel %vm2797, %v2787, 2102212464
        %v2800 = vsel %vm2796, %v2784, %v2799
        %v2801 = vsel %vm2795, %v2798, %v2800
        %v2802 = vsel %vm2794, %v2781, %v2784
        %v2803 = vsel %vm2797, %v2790, 920167782
        %v2804 = vsel %vm2796, %v2787, %v2803
        %v2805 = vsel %vm2795, %v2802, %v2804
        %v2806 = vsel %vm2794, %v2784, %v2787
        %v2807 = vsel %vm2797, %v2793, 1326507024
        %v2808 = vsel %vm2796, %v2790, %v2807
        %v2809 = vsel %vm2795, %v2806, %v2808
        %v2810 = vshll.u32 %v2770, 8
        %v2811 = vmul.u32.u64.compose %v2810, %v2809
        %v2812 = vextract.low.u32 %v2811
        %v2813 = vextract.high.u32 %v2811
        %v2814 = vmul.u32.u64.compose %v2810, %v2805
        %v2815 = vextract.low.u32 %v2814
        %v2816 = vextract.high.u32 %v2814
        %v2817 = vmul.u32 %v2810, %v2801
        %v2818 = vadd.s32 %v2813, %v2815
        %vm2819 = vc.u32 %v2813, %v2815
        %v2820 = vadd.s32 %v2816, 1
        %v2821 = vsel %vm2819, %v2820, %v2816
        %v2822 = vadd.s32 %v2817, %v2821
        %v2823 = vadd.s32 %v2822, 536870912
        %v2824 = vshrl.u32 %v2823, 30
        %v2825 = vshll.u32 %v2824, 30
        %v2826 = vsub.s32 %v2822, %v2825
        %vm2827 = vcmp.lt.s32.totalorder %v2826, 0
        %v2828 = vsub.s32 0, %v2826
        %v2829 = vsel %vm2827, %v2828, %v2826
        %v2830 = vclz %v2829
        %v2831 = vsub.s32 %v2830, 2
        %vm2832 = vcmp.gt.s32.totalorder 0, %v2831
        %v2833 = vsel %vm2832, 0, %v2831
        %v2834 = vsub.s32 32, %v2833
        %v2835 = vshll.u32 %v2826, %v2833
        %v2836 = vshrl.u32 %v2818, %v2834
        %v2837 = vor.u32 %v2835, %v2836
        %v2838 = vsub.s32 4294967266, %v2833
        %v2839 = vadd.s32 %v2838, 127
        %v2840 = vshll.u32 %v2839, 23
        %v2841 = vor.u32 4788187, %v2840
        %v2842 = vand.u32 2147483647, %v2841
        %v2844 = vcvt.s32.f32 %v2837
        %v2845 = vmul.f32 %v2844, %v2842
        %v2846 = vxor.u32 %v2845, 2147483648
        %v2847 = vsel %vm2764, %v2846, %v2845
        %v2848 = vsub.s32 4, %v2824
        %v2849 = vsel %vm2764, %v2848, %v2824
        %v2850 = vsel %vm2763, %v1297, %v2847
        %v2851 = vsel %vm2763, 0, %v2849
        %v2852 = vcosq.f32.pop %v2850
        %v2853 = vsinq.f32.pop %v2850
        %vm2854 = vweird.f32 %v1297
        %v2855 = vadd.s32 %v2851, 3
        %v2856 = vand.u32 %v2855, 3
        %vm2857 = vcmp.lt.s32.totalorder %v2856, 2
        %vm2858 = vcmp.eq.s32.totalorder %v2856, 0
        %v2859 = vxor.u32 %v2853, 2147483648
        %v2860 = vsel %vm2858, %v2852, %v2859
        %vm2861 = vcmp.eq.s32.totalorder %v2856, 2
        %v2862 = vxor.u32 %v2852, 2147483648
        %v2863 = vsel %vm2861, %v2862, %v2853
        %v2864 = vsel %vm2857, %v2860, %v2863
        %v2865 = vsel %vm2854, nan, %v2864
        %v2866 = vand.u32 2147483647, %v1303
        %vm2867 = vcmp.le.f32.partialorder %v2866, 0.7853982
        %vm2868 = vcmp.lt.s32.totalorder %v1303, 0
        %v2869 = vand.u32 %v1303, 2139095040
        %v2870 = vshrl.u32 %v2869, 23
        %v2871 = vsub.s32 %v2870, 127
        %v2872 = vand.u32 2147483647, %v1303
        %v2873 = vand.u32 %v2872, 8388607
        %v2874 = vor.u32 %v2873, 8388608
        %v2875 = vsub.s32 0, %v2874
        %v2876 = vadd.s32 %v2871, 1
        %vm2877 = vcmp.gt.s32.totalorder %v2876, 0
        %v2878 = vsel %vm2877, %v2876, 0
        %v2879 = vshrl.u32 %v2878, 5
        %v2880 = vand.u32 %v2878, 31
        %v2881 = vsub.s32 32, %v2880
        %v2882 = vshrl.u32 683565275, %v2881
        %v2883 = vshll.u32 683565275, %v2880
        %v2884 = vshrl.u32 2475754826, %v2881
        %v2885 = vor.u32 %v2883, %v2884
        %v2886 = vshll.u32 2475754826, %v2880
        %v2887 = vshrl.u32 2131351028, %v2881
        %v2888 = vor.u32 %v2886, %v2887
        %v2889 = vshll.u32 2131351028, %v2880
        %v2890 = vshrl.u32 2102212464, %v2881
        %v2891 = vor.u32 %v2889, %v2890
        %v2892 = vshll.u32 2102212464, %v2880
        %v2893 = vshrl.u32 920167782, %v2881
        %v2894 = vor.u32 %v2892, %v2893
        %v2895 = vshll.u32 920167782, %v2880
        %v2896 = vshrl.u32 1326507024, %v2881
        %v2897 = vor.u32 %v2895, %v2896
        %vm2898 = vcmp.lt.s32.totalorder %v2879, 1
        %vm2899 = vcmp.lt.s32.totalorder %v2879, 2
        %vm2900 = vcmp.lt.s32.totalorder %v2879, 3
        %vm2901 = vcmp.lt.s32.totalorder %v2879, 4
        %v2902 = vsel %vm2898, %v2882, %v2885
        %v2903 = vsel %vm2901, %v2891, 2102212464
        %v2904 = vsel %vm2900, %v2888, %v2903
        %v2905 = vsel %vm2899, %v2902, %v2904
        %v2906 = vsel %vm2898, %v2885, %v2888
        %v2907 = vsel %vm2901, %v2894, 920167782
        %v2908 = vsel %vm2900, %v2891, %v2907
        %v2909 = vsel %vm2899, %v2906, %v2908
        %v2910 = vsel %vm2898, %v2888, %v2891
        %v2911 = vsel %vm2901, %v2897, 1326507024
        %v2912 = vsel %vm2900, %v2894, %v2911
        %v2913 = vsel %vm2899, %v2910, %v2912
        %v2914 = vshll.u32 %v2874, 8
        %v2915 = vmul.u32.u64.compose %v2914, %v2913
        %v2916 = vextract.low.u32 %v2915
        %v2917 = vextract.high.u32 %v2915
        %v2918 = vmul.u32.u64.compose %v2914, %v2909
        %v2919 = vextract.low.u32 %v2918
        %v2920 = vextract.high.u32 %v2918
        %v2921 = vmul.u32 %v2914, %v2905
        %v2922 = vadd.s32 %v2917, %v2919
        %vm2923 = vc.u32 %v2917, %v2919
        %v2924 = vadd.s32 %v2920, 1
        %v2925 = vsel %vm2923, %v2924, %v2920
        %v2926 = vadd.s32 %v2921, %v2925
        %v2927 = vadd.s32 %v2926, 536870912
        %v2928 = vshrl.u32 %v2927, 30
        %v2929 = vshll.u32 %v2928, 30
        %v2930 = vsub.s32 %v2926, %v2929
        %vm2931 = vcmp.lt.s32.totalorder %v2930, 0
        %v2932 = vsub.s32 0, %v2930
        %v2933 = vsel %vm2931, %v2932, %v2930
        %v2934 = vclz %v2933
        %v2935 = vsub.s32 %v2934, 2
        %vm2936 = vcmp.gt.s32.totalorder 0, %v2935
        %v2937 = vsel %vm2936, 0, %v2935
        %v2938 = vsub.s32 32, %v2937
        %v2939 = vshll.u32 %v2930, %v2937
        %v2940 = vshrl.u32 %v2922, %v2938
        %v2941 = vor.u32 %v2939, %v2940
        %v2942 = vsub.s32 4294967266, %v2937
        %v2943 = vadd.s32 %v2942, 127
        %v2944 = vshll.u32 %v2943, 23
        %v2945 = vor.u32 4788187, %v2944
        %v2946 = vand.u32 2147483647, %v2945
        %v2948 = vcvt.s32.f32 %v2941
        %v2949 = vmul.f32 %v2948, %v2946
        %v2950 = vxor.u32 %v2949, 2147483648
        %v2951 = vsel %vm2868, %v2950, %v2949
        %v2952 = vsub.s32 4, %v2928
        %v2953 = vsel %vm2868, %v2952, %v2928
        %v2954 = vsel %vm2867, %v1303, %v2951
        %v2955 = vsel %vm2867, 0, %v2953
        %v2956 = vcosq.f32.pop %v2954
        %v2957 = vsinq.f32.pop %v2954
        %vm2958 = vweird.f32 %v1303
        %v2959 = vadd.s32 %v2955, 3
        %v2960 = vand.u32 %v2959, 3
        %vm2961 = vcmp.lt.s32.totalorder %v2960, 2
        %vm2962 = vcmp.eq.s32.totalorder %v2960, 0
        %v2963 = vxor.u32 %v2957, 2147483648
        %v2964 = vsel %vm2962, %v2956, %v2963
        %vm2965 = vcmp.eq.s32.totalorder %v2960, 2
        %v2966 = vxor.u32 %v2956, 2147483648
        %v2967 = vsel %vm2965, %v2966, %v2957
        %v2968 = vsel %vm2961, %v2964, %v2967
        %v2969 = vsel %vm2958, nan, %v2968
        %2970 = vst [vmem:[%s137] sm:$0xff] %v1409
        %2971 = vst [vmem:[%s137 + $0x8] sm:$0xff] %v1513
        %2972 = vst [vmem:[%s137 + $0x10] sm:$0xff] %v1617
        %2973 = vst [vmem:[%s137 + $0x18] sm:$0xff] %v1721
        %2974 = vst [vmem:[%s137 + $0x20] sm:$0xff] %v1825
        %2975 = vst [vmem:[%s137 + $0x28] sm:$0xff] %v1929
        %2976 = vst [vmem:[%s137 + $0x30] sm:$0xff] %v2033
        %2977 = vst [vmem:[%s137 + $0x38] sm:$0xff] %v2137
        %2978 = vst [vmem:[%s137 + $0x40] sm:$0xff] %v2241
        %2979 = vst [vmem:[%s137 + $0x48] sm:$0xff] %v2345
        %2980 = vst [vmem:[%s137 + $0x50] sm:$0xff] %v2449
        %2981 = vst [vmem:[%s137 + $0x58] sm:$0xff] %v2553
        %2982 = vst [vmem:[%s137 + $0x60] sm:$0xff] %v2657
        %2983 = vst [vmem:[%s137 + $0x68] sm:$0xff] %v2761
        %2984 = vst [vmem:[%s137 + $0x70] sm:$0xff] %v2865
        %2985 = vst [vmem:[%s137 + $0x78] sm:$0xff] %v2969
        %s2986 = sand.u32 %s71, 1
        %s2987 = scalar_lea.sflag [#allocation3], %s2986
        %s2988 = sand.u32 %s71, 1
        %s2989 = smul.addr %s2988, 128
        %s2990 = scalar_lea.vmem [#allocation2], %s2989
        // Predicated region
        $region29: #{tpu_custom_call.1} parent=27 // pred_check
          %p2991 = pneg %p81
        $region30: #{tpu_custom_call.1} parent=27 // pred_check_branch
          %2993 = sbr.rel (%p2991) target = $region32
        $region31: #{tpu_custom_call.1} parent=27 // pred_region
          %s2994 = smul.u32 16, %s16
          %s2996 = ssub.s32 2048, 2048
          %2997 = vsyncadd %s2987, %s2996
          %s2998 = smul.addr %s2994, 128
          %s2999 = scalar_lea.hbm %s2, %s2998
          %s3000 = sshll.u32 %s2990, 4
          %s3001 = int_to_ptr.vmem [resolvable:$true] %s3000
          %3006 = dma.vmem_to_hbm [thread:$0]  %s3001, 2048, %s2999, %s2987, 128, 128, 8
        $region32: #{tpu_custom_call.1} parent=27 // pred_fallthru
          _
      $region28: #{tpu_custom_call.1} parent=5 // pred_fallthru
        _
      %p3007 = scmp.le.s32.totalorder 2, %s11
      // Predicated region
      $region33: #{tpu_custom_call.1} parent=5 // pred_check
        %p3008 = pneg %p3007
      $region34: #{tpu_custom_call.1} parent=5 // pred_check_branch
        %3010 = sbr.rel (%p3008) target = $region36
      $region35: #{tpu_custom_call.1} parent=5 // pred_region
        %s3011 = ssub.s32 %s11, 2
        // Predicated region
        $region37: #{tpu_custom_call.1} parent=35 // pred_check
          %p3012 = pneg %p87
        $region38: #{tpu_custom_call.1} parent=35 // pred_check_branch
          %3014 = sbr.rel (%p3012) target = $region40
        $region39: #{tpu_custom_call.1} parent=35 // pred_region
          %s3015 = sand.u32 %s72, 1
          %s3016 = scalar_lea.sflag [#allocation3], %s3015
          %s3017 = sand.u32 %s72, 1
          %s3018 = smul.addr %s3017, 128
          %s3019 = scalar_lea.vmem [#allocation2], %s3018
          %3020 = dma.done %s3016, 2048
        $region40: #{tpu_custom_call.1} parent=35 // pred_fallthru
          _
      $region36: #{tpu_custom_call.1} parent=5 // pred_fallthru
        _
    $region6: #{tpu_custom_call.1} parent=1 // loop_footer
      %s15 = sadd.s32 1, %s11
    $region7: #{tpu_custom_call.1} parent=1 // loop_footer_branch
      %10 = sbr.rel target = $region3
    $region8: #{tpu_custom_call.1} parent=1 // loop_exit
      _
    %3021 = vsyncpa [#allocation3], 1
    %s3022 = scalar_lea.sflag [#allocation3], 1
    %3023 = vsyncpa %s3022, 1

</llo_original>
